<compile_context>
chip_gen: v7x
topology: tpu7x:2x2x1
jax: 0.10.0
libtpu: 0.0.40
codegen_flags: <defaults>
</compile_context>

<pallas_src>
import functools

import jax
import jax.numpy as jnp
import numpy as np
from jax.experimental import pallas as pl
from jax.experimental.pallas import tpu as pltpu


# ------------------------------ fused kernel ---------------------------------

def _decoder_kernel(num_up, n_shift, h_lo, t_valid, *refs):
    """Whole decoder for one (batch, time-tile) block; all intermediates in VMEM.

    ref order:
      x     (1, 1, rows, K*cs)   im2col'd input incl. halo rows
      w_in  (K*cs, C), b_in (1, C), ln_g (1, C), ln_b (1, C),
      [w_up_i (P*C, P*f*C), b_up_i (1, P*f*C)] * num_up,
      a0 (1,1 SMEM), w_c1 (n_shift*F*C, F*Cm), b_c1 (1, F*Cm),
      a1 (1,1 SMEM), w_c2 (F*Cm, F), b2 (1,1 SMEM),
      out (1, Tt, F)
    Phase-major encoding after the upsamples: z[t, m*C + c] == y[F*t + m, c].
    """
    x_ref, w_in_ref, b_in_ref, g_ref, beta_ref = refs[:5]
    pos = 5
    ups = []
    for _ in range(num_up):
        ups.append((refs[pos], refs[pos + 1]))
        pos += 2
    a0_ref, w1_ref, b1_ref, a1_ref, w2_ref, b2_ref, o_ref = refs[pos:pos + 7]

    tt = o_ref.shape[1]                      # output (coarse) rows in this tile
    rows = x_ref.shape[2]                    # tt + h_lo + h_hi (halo included)

    # --- scale_in: Conv1d(cs -> C, K) as ONE im2col matmul + LayerNorm(C) -----
    h = jnp.dot(x_ref[0, 0], w_in_ref[...],
                preferred_element_type=jnp.float32) + b_in_ref[0]
    mean = jnp.mean(h, axis=-1, keepdims=True)
    var = jnp.mean(h * h, axis=-1, keepdims=True) - mean * mean   # one XLU pass
    h = (h - mean) * jax.lax.rsqrt(var + 1e-5) * g_ref[0] + beta_ref[0]

    # --- convnet: each _Upsample (Tanh + ConvTranspose1d, stride==kernel) is
    #     ONE matmul in the phase-major encoding (block-diag weights). ---------
    z = h
    for w_ref, b_ref in ups:
        z = jnp.dot(jnp.tanh(z).astype(w_ref.dtype), w_ref[...],
                    preferred_element_type=jnp.float32) + b_ref[0]
    fc = z.shape[1]                          # F*C (=128 here) -> lane-dense

    # --- scale_out: PReLU -> Conv1d(C,16,17,pad=8) -> PReLU -> Conv1d(16,1)
    #     -> Tanh.  Halo / out-of-sequence rows are zeroed (== the conv's zero
    #     padding); the K=17 conv is n_shift shifted matmuls accumulated in f32
    #     (no materialized concatenation, no scratch memset). ------------------
    a0 = a0_ref[0, 0]
    gi = jax.lax.broadcasted_iota(jnp.int32, (rows, 1), 0) \
        + (pl.program_id(1) * tt - h_lo)                 # global coarse row idx
    valid = jnp.logical_and(gi >= 0, gi < t_valid).astype(jnp.float32)
    zp = (jnp.where(z >= 0.0, z, a0 * z) * valid).astype(w1_ref.dtype)

    c1 = jnp.dot(zp[0:tt, :], w1_ref[0:fc, :],
                 preferred_element_type=jnp.float32)
    for s in range(1, n_shift):
        c1 = c1 + jnp.dot(zp[s:s + tt, :], w1_ref[s * fc:(s + 1) * fc, :],
                          preferred_element_type=jnp.float32)
    c1 = c1 + b1_ref[0]
    a1 = a1_ref[0, 0]
    c1 = jnp.where(c1 >= 0.0, c1, a1 * c1)
    y = jnp.dot(c1.astype(w2_ref.dtype), w2_ref[...],
                preferred_element_type=jnp.float32) + b2_ref[0, 0]
    # o[0, t, m] is the decoder sample at fine time F*(tile_start + t) + m.
    o_ref[0] = jnp.tanh(y).astype(o_ref.dtype)


# ------------------------------ wrappers --------------------------------------

def _rep_spec(a):
    nd = a.ndim
    return pl.BlockSpec(a.shape, lambda b, t, _nd=nd: (0,) * _nd)


def _smem_spec():
    return pl.BlockSpec(memory_space=pltpu.MemorySpace.SMEM)


def nwcnet_decoder_forward(x_ncl, packed, context_window, *, t_tile=512):
    """x_ncl: (B, code_size, T), exactly like the PyTorch module."""
    left, right = context_window
    B, cs, T_in = x_ncl.shape
    K = packed["K_in"]
    F = packed["F"]
    n_shift = packed["n_shift"]
    h_lo = -packed["s_min"]
    h_hi = packed["s_max"]
    mm_dtype = packed["mm_dtype"]
    Tpad = T_in + left + right
    T0 = Tpad - K + 1                      # coarse output length (== T_in here)

    # Wrapper-side im2col: x_im[b, t, k*cs + c] = x_pad[b, c, t+k]; matches the
    # (K*cs, C) row layout of w_in_mat.  One small XLA relayout, no per-tap
    # slicing inside the kernel.
    x_pad = jnp.pad(x_ncl, ((0, 0), (0, 0), (left, right))).astype(jnp.float32)
    x_im = jnp.concatenate([x_pad[:, :, k:k + T0] for k in range(K)], axis=1)
    x_im = jnp.transpose(x_im, (0, 2, 1))                     # (B, T0, K*cs)

    # Time tiling with a recomputed halo of h_lo/h_hi coarse rows each side.
    Tt = min(int(t_tile), ((T0 + 7) // 8) * 8)
    Tt = max(8, (Tt // 8) * 8)
    n_t = -(-T0 // Tt)
    Ttot = n_t * Tt
    rows = Tt + h_lo + h_hi
    x_imp = jnp.pad(x_im, ((0, 0), (h_lo, h_hi + Ttot - T0), (0, 0)))
    x_tiles = jnp.stack([x_imp[:, i * Tt:i * Tt + rows, :] for i in range(n_t)],
                        axis=1).astype(mm_dtype)              # (B, n_t, rows, K*cs)

    operands = [x_tiles, packed["w_in_mat"], packed["b_in"], packed["ln_g"],
                packed["ln_b"]]
    in_specs = [pl.BlockSpec((1, 1, rows, K * cs), lambda b, t: (b, t, 0, 0)),
                _rep_spec(packed["w_in_mat"]), _rep_spec(packed["b_in"]),
                _rep_spec(packed["ln_g"]), _rep_spec(packed["ln_b"])]
    for w_up, b_up in packed["ups"]:
        operands += [w_up, b_up]
        in_specs += [_rep_spec(w_up), _rep_spec(b_up)]
    operands += [packed["a0"], packed["w_c1"], packed["b_c1"],
                 packed["a1"], packed["w_c2"], packed["b2"]]
    in_specs += [_smem_spec(), _rep_spec(packed["w_c1"]),
                 _rep_spec(packed["b_c1"]), _smem_spec(),
                 _rep_spec(packed["w_c2"]), _smem_spec()]

    kernel = functools.partial(_decoder_kernel, len(packed["ups"]),
                               n_shift, h_lo, T0)

    out = pl.pallas_call(
        kernel,
        out_shape=jax.ShapeDtypeStruct((B, Ttot, F), jnp.float32),
        grid=(B, n_t),
        in_specs=in_specs,
        out_specs=pl.BlockSpec((1, Tt, F), lambda b, t: (b, t, 0)),
        compiler_params=pltpu.CompilerParams(
            dimension_semantics=("parallel", "parallel"),
            vmem_limit_bytes=48 * 1024 * 1024),
    )(*operands)
    # (B, T0, F) -> (B, 1, F*T0): out[b, t, m] is the sample at time F*t + m.
    return out[:, :T0, :].reshape(B, 1, T0 * F)


# ---------------------- host-side weight packing ------------------------------

def pack_params(p, mm_dtype=jnp.float32):
    """PyTorch-layout params -> fused-kernel operands + static layout info."""
    f32 = jnp.float32
    w_in = np.asarray(p["w_in"], np.float32)              # (C, cs, K)
    C, cs, K = w_in.shape
    w_in_mat = np.transpose(w_in, (2, 1, 0)).reshape(K * cs, C)

    ups = []
    P = 1
    for wt, bu in p["ups"]:
        wt = np.asarray(wt, np.float32)                   # (in=C, out=C, f)
        f = wt.shape[2]
        sub = np.transpose(wt, (0, 2, 1)).reshape(C, f * C)   # [ic, j*C+oc]
        w_blk = np.zeros((P * C, P * f * C), np.float32)
        for j in range(P):
            w_blk[j * C:(j + 1) * C, j * f * C:(j + 1) * f * C] = sub
        b_t = np.tile(np.asarray(bu, np.float32), P * f)[None, :]
        ups.append((jnp.asarray(w_blk, mm_dtype), jnp.asarray(b_t)))
        P *= f
    F = P

    w1 = np.asarray(p["w1"], np.float32)                  # (Cm, C, Kc)
    Cm, _, Kc = w1.shape
    pad = Kc // 2
    s_min = (-pad) // F                                   # floor division
    s_max = (F - 1 + pad) // F
    n_shift = s_max - s_min + 1
    w_c1 = np.zeros((n_shift * F * C, F * Cm), np.float32)
    for m in range(F):
        for si in range(n_shift):
            s = si + s_min
            for mp in range(F):
                d = F * s + mp - m + pad
                if 0 <= d < Kc:
                    w_c1[si * F * C + mp * C: si * F * C + (mp + 1) * C,
                         m * Cm:(m + 1) * Cm] = w1[:, :, d].T
    b_c1 = np.tile(np.asarray(p["b1"], np.float32), F)[None, :]

    w2 = np.asarray(p["w2"], np.float32).reshape(Cm)      # (1, Cm, 1) -> (Cm,)
    w_c2 = np.zeros((F * Cm, F), np.float32)
    for m in range(F):
        w_c2[m * Cm:(m + 1) * Cm, m] = w2

    return dict(
        K_in=K, C=C, C_mid=Cm, F=F, n_shift=n_shift, s_min=s_min, s_max=s_max,
        mm_dtype=mm_dtype,
        w_in_mat=jnp.asarray(w_in_mat, mm_dtype),
        b_in=jnp.asarray(p["b_in"], f32).reshape(1, C),
        ln_g=jnp.asarray(p["ln_g"], f32).reshape(1, C),
        ln_b=jnp.asarray(p["ln_b"], f32).reshape(1, C),
        ups=ups,
        a0=jnp.full((1, 1), float(p["a0"]), f32),
        w_c1=jnp.asarray(w_c1, mm_dtype),
        b_c1=jnp.asarray(b_c1),
        a1=jnp.full((1, 1), float(p["a1"]), f32),
        w_c2=jnp.asarray(w_c2, mm_dtype),
        b2=jnp.asarray(p["b2"], f32).reshape(1, 1),
    )


# --------------------------- plain-JAX reference ------------------------------

def _reference(x_ncl, p, context_window):
    left, right = context_window
    x = jnp.pad(x_ncl, ((0, 0), (0, 0), (left, right))).astype(jnp.float32)
    w_in = p["w_in"]
    K = w_in.shape[2]
    T = x.shape[2] - K + 1
    h = sum(jnp.einsum("bct,oc->bto", x[:, :, k:k + T], w_in[:, :, k])
            for k in range(K)) + p["b_in"]
    mean = h.mean(-1, keepdims=True)
    var = ((h - mean) ** 2).mean(-1, keepdims=True)
    h = (h - mean) * jax.lax.rsqrt(var + 1e-5) * p["ln_g"] + p["ln_b"]
    for wt, bu in p["ups"]:
        a = jnp.tanh(h)
        f = wt.shape[2]
        y = jnp.einsum("bti,iof->btfo", a, wt) + bu
        h = y.reshape(h.shape[0], h.shape[1] * f, -1)
    h = jnp.where(h >= 0, h, p["a0"] * h)
    Kc = p["w1"].shape[2]
    hp = jnp.pad(h, ((0, 0), (Kc // 2, Kc // 2), (0, 0)))
    Tt = h.shape[1]
    c1 = sum(jnp.einsum("btc,oc->bto", hp[:, d:d + Tt, :], p["w1"][:, :, d])
             for d in range(Kc)) + p["b1"]
    c1 = jnp.where(c1 >= 0, c1, p["a1"] * c1)
    y = jnp.tanh(jnp.einsum("bto,o->bt", c1, p["w2"][0, :, 0]) + p["b2"][0])
    return y[:, None, :]


# ----------------------------------- main --------------------------------------

if __name__ == "__main__":
    B, code_size, T_in = 2, 8, 8
    in_channels = 32
    context_window = [2, 2]
    K = sum(context_window) + 1
    upsample_factors = [2, 2]

    key = jax.random.PRNGKey(0)
    ks = list(jax.random.split(key, 10))

    # PyTorch-layout synthetic parameters (Conv1d init: N(0, 0.02), bias 0;
    # ConvTranspose / LayerNorm get small nonzero values to exercise all paths).
    params = {
        "w_in": 0.02 * jax.random.normal(ks[0], (in_channels, code_size, K)),
        "b_in": jnp.zeros((in_channels,), jnp.float32),
        "ln_g": 1.0 + 0.1 * jax.random.normal(ks[1], (in_channels,)),
        "ln_b": 0.05 * jax.random.normal(ks[2], (in_channels,)),
        "ups": [],
        "a0": 0.142,
        "w1": 0.02 * jax.random.normal(ks[3], (16, in_channels, 17)),
        "b1": jnp.zeros((16,), jnp.float32),
        "a1": 0.142,
        "w2": 0.02 * jax.random.normal(ks[4], (1, 16, 1)),
        "b2": jnp.zeros((1,), jnp.float32),
    }
    for i, f in enumerate(upsample_factors):
        wt = 0.02 * jax.random.normal(ks[5 + i],
                                      (in_channels, in_channels, f))
        bu = 0.01 * jax.random.normal(ks[7 + i], (in_channels,))
        params["ups"].append((wt, bu))

    x = jax.random.normal(ks[9], (B, code_size, T_in), jnp.float32)

    ref = _reference(x, params, context_window)
    T_total = T_in * int(np.prod(upsample_factors))

    # f32 MXU operands: strict tolerance.
    packed_f32 = pack_params(params, mm_dtype=jnp.float32)
    fwd_f32 = jax.jit(lambda inp: nwcnet_decoder_forward(inp, packed_f32,
                                                         context_window))
    out_f32 = fwd_f32(x)
    jax.block_until_ready(out_f32)
    assert out_f32.shape == (B, 1, T_total), out_f32.shape
    err_f32 = float(jnp.max(jnp.abs(out_f32 - ref)))
    assert err_f32 < 2e-5, err_f32

    # bf16 MXU operands (perf path, f32 accumulation): looser tolerance.
    packed_bf16 = pack_params(params, mm_dtype=jnp.bfloat16)
    fwd_bf16 = jax.jit(lambda inp: nwcnet_decoder_forward(inp, packed_bf16,
                                                          context_window))
    out_bf16 = fwd_bf16(x)
    jax.block_until_ready(out_bf16)
    assert out_bf16.shape == (B, 1, T_total), out_bf16.shape
    err_bf16 = float(jnp.max(jnp.abs(out_bf16 - ref)))
    assert err_bf16 < 5e-2, err_bf16

    print("KERNEL_OK")
</pallas_src>

<mosaic_0001>
module attributes {stable_mosaic.version = 11 : i64} {
  func.func @_decoder_kernel(%arg0: i32, %arg1: i32, %arg2: memref<1x1x12x40xf32, #tpu.memory_space<vmem>>, %arg3: memref<40x32xf32, #tpu.memory_space<vmem>>, %arg4: memref<1x32xf32, #tpu.memory_space<vmem>>, %arg5: memref<1x32xf32, #tpu.memory_space<vmem>>, %arg6: memref<1x32xf32, #tpu.memory_space<vmem>>, %arg7: memref<32x64xf32, #tpu.memory_space<vmem>>, %arg8: memref<1x64xf32, #tpu.memory_space<vmem>>, %arg9: memref<64x128xf32, #tpu.memory_space<vmem>>, %arg10: memref<1x128xf32, #tpu.memory_space<vmem>>, %arg11: memref<1x1xf32, #tpu.memory_space<smem>>, %arg12: memref<640x64xf32, #tpu.memory_space<vmem>>, %arg13: memref<1x64xf32, #tpu.memory_space<vmem>>, %arg14: memref<1x1xf32, #tpu.memory_space<smem>>, %arg15: memref<64x4xf32, #tpu.memory_space<vmem>>, %arg16: memref<1x1xf32, #tpu.memory_space<smem>>, %arg17: memref<1x8x4xf32, #tpu.memory_space<vmem>>) attributes {dimension_semantics = [#tpu.dimension_semantics<parallel>, #tpu.dimension_semantics<parallel>], iteration_bounds = array<i64: 2, 1>, scalar_prefetch = 0 : i64, scratch_operands = 0 : i64, tpu.core_type = #tpu.core_type<tc>, window_params = [{transform_indices = @transform_0, window_bounds = array<i64: 1, 1, 12, 40>}, {pipeline_mode = #tpu.pipeline_mode<synchronous>, transform_indices = @transform_1, window_bounds = array<i64: 40, 32>}, {pipeline_mode = #tpu.pipeline_mode<synchronous>, transform_indices = @transform_2, window_bounds = array<i64: 1, 32>}, {pipeline_mode = #tpu.pipeline_mode<synchronous>, transform_indices = @transform_3, window_bounds = array<i64: 1, 32>}, {pipeline_mode = #tpu.pipeline_mode<synchronous>, transform_indices = @transform_4, window_bounds = array<i64: 1, 32>}, {pipeline_mode = #tpu.pipeline_mode<synchronous>, transform_indices = @transform_5, window_bounds = array<i64: 32, 64>}, {pipeline_mode = #tpu.pipeline_mode<synchronous>, transform_indices = @transform_6, window_bounds = array<i64: 1, 64>}, {pipeline_mode = #tpu.pipeline_mode<synchronous>, transform_indices = @transform_7, window_bounds = array<i64: 64, 128>}, {pipeline_mode = #tpu.pipeline_mode<synchronous>, transform_indices = @transform_8, window_bounds = array<i64: 1, 128>}, {transform_indices = @transform_9, window_bounds = array<i64: 1, 1>}, {pipeline_mode = #tpu.pipeline_mode<synchronous>, transform_indices = @transform_10, window_bounds = array<i64: 640, 64>}, {pipeline_mode = #tpu.pipeline_mode<synchronous>, transform_indices = @transform_11, window_bounds = array<i64: 1, 64>}, {transform_indices = @transform_12, window_bounds = array<i64: 1, 1>}, {pipeline_mode = #tpu.pipeline_mode<synchronous>, transform_indices = @transform_13, window_bounds = array<i64: 64, 4>}, {transform_indices = @transform_14, window_bounds = array<i64: 1, 1>}, {transform_indices = @transform_15, window_bounds = array<i64: 1, 8, 4>}]} {
    %c0 = arith.constant 0 : index
    %c0_0 = arith.constant 0 : index
    %c0_1 = arith.constant 0 : index
    %c0_2 = arith.constant 0 : index
    %0 = vector.load %arg2[%c0, %c0_0, %c0_1, %c0_2] : memref<1x1x12x40xf32, #tpu.memory_space<vmem>>, vector<1x1x12x40xf32>
    %1 = vector.shape_cast %0 : vector<1x1x12x40xf32> to vector<12x40xf32>
    %c0_3 = arith.constant 0 : index
    %c0_4 = arith.constant 0 : index
    %2 = vector.load %arg3[%c0_3, %c0_4] : memref<40x32xf32, #tpu.memory_space<vmem>>, vector<40x32xf32>
    %cst = arith.constant dense<0.000000e+00> : vector<12x32xf32>
    %3 = tpu.matmul %1, %2, %cst {dimension_numbers = #tpu.dot_dimension_numbers<[1], [0], [0], [1], [0, 0, 1, 1], [], []>} : vector<12x40xf32>, vector<40x32xf32>, vector<12x32xf32> -> vector<12x32xf32>
    %c0_5 = arith.constant 0 : index
    %c0_6 = arith.constant 0 : index
    %4 = vector.load %arg4[%c0_5, %c0_6] : memref<1x32xf32, #tpu.memory_space<vmem>>, vector<1x32xf32>
    %5 = vector.shape_cast %4 : vector<1x32xf32> to vector<32xf32>
    %6 = vector.shape_cast %5 : vector<32xf32> to vector<1x32xf32>
    %7 = vector.broadcast %6 : vector<1x32xf32> to vector<12x32xf32>
    %8 = arith.addf %3, %7 : vector<12x32xf32>
    %cst_7 = arith.constant dense<0.000000e+00> : vector<12xf32>
    %9 = vector.multi_reduction <add>, %8, %cst_7 [1] : vector<12x32xf32> to vector<12xf32>
    %10 = vector.shape_cast %9 : vector<12xf32> to vector<12x1xf32>
    %cst_8 = arith.constant 3.200000e+01 : f32
    %11 = vector.broadcast %cst_8 : f32 to vector<12x1xf32>
    %12 = arith.divf %10, %11 : vector<12x1xf32>
    %13 = arith.mulf %8, %8 : vector<12x32xf32>
    %cst_9 = arith.constant dense<0.000000e+00> : vector<12xf32>
    %14 = vector.multi_reduction <add>, %13, %cst_9 [1] : vector<12x32xf32> to vector<12xf32>
    %15 = vector.shape_cast %14 : vector<12xf32> to vector<12x1xf32>
    %cst_10 = arith.constant 3.200000e+01 : f32
    %16 = vector.broadcast %cst_10 : f32 to vector<12x1xf32>
    %17 = arith.divf %15, %16 : vector<12x1xf32>
    %18 = arith.mulf %12, %12 : vector<12x1xf32>
    %19 = arith.subf %17, %18 : vector<12x1xf32>
    %20 = vector.broadcast %12 : vector<12x1xf32> to vector<12x32xf32>
    %21 = arith.subf %8, %20 : vector<12x32xf32>
    %cst_11 = arith.constant 9.99999974E-6 : f32
    %22 = vector.broadcast %cst_11 : f32 to vector<12x1xf32>
    %23 = arith.addf %19, %22 : vector<12x1xf32>
    %24 = math.rsqrt %23 : vector<12x1xf32>
    %25 = vector.broadcast %24 : vector<12x1xf32> to vector<12x32xf32>
    %26 = arith.mulf %21, %25 : vector<12x32xf32>
    %c0_12 = arith.constant 0 : index
    %c0_13 = arith.constant 0 : index
    %27 = vector.load %arg5[%c0_12, %c0_13] : memref<1x32xf32, #tpu.memory_space<vmem>>, vector<1x32xf32>
    %28 = vector.shape_cast %27 : vector<1x32xf32> to vector<32xf32>
    %29 = vector.shape_cast %28 : vector<32xf32> to vector<1x32xf32>
    %30 = vector.broadcast %29 : vector<1x32xf32> to vector<12x32xf32>
    %31 = arith.mulf %26, %30 : vector<12x32xf32>
    %c0_14 = arith.constant 0 : index
    %c0_15 = arith.constant 0 : index
    %32 = vector.load %arg6[%c0_14, %c0_15] : memref<1x32xf32, #tpu.memory_space<vmem>>, vector<1x32xf32>
    %33 = vector.shape_cast %32 : vector<1x32xf32> to vector<32xf32>
    %34 = vector.shape_cast %33 : vector<32xf32> to vector<1x32xf32>
    %35 = vector.broadcast %34 : vector<1x32xf32> to vector<12x32xf32>
    %36 = arith.addf %31, %35 : vector<12x32xf32>
    %37 = math.tanh %36 : vector<12x32xf32>
    %c0_16 = arith.constant 0 : index
    %c0_17 = arith.constant 0 : index
    %38 = vector.load %arg7[%c0_16, %c0_17] : memref<32x64xf32, #tpu.memory_space<vmem>>, vector<32x64xf32>
    %cst_18 = arith.constant dense<0.000000e+00> : vector<12x64xf32>
    %39 = tpu.matmul %37, %38, %cst_18 {dimension_numbers = #tpu.dot_dimension_numbers<[1], [0], [0], [1], [0, 0, 1, 1], [], []>} : vector<12x32xf32>, vector<32x64xf32>, vector<12x64xf32> -> vector<12x64xf32>
    %c0_19 = arith.constant 0 : index
    %c0_20 = arith.constant 0 : index
    %40 = vector.load %arg8[%c0_19, %c0_20] : memref<1x64xf32, #tpu.memory_space<vmem>>, vector<1x64xf32>
    %41 = vector.shape_cast %40 : vector<1x64xf32> to vector<64xf32>
    %42 = vector.shape_cast %41 : vector<64xf32> to vector<1x64xf32>
    %43 = vector.broadcast %42 : vector<1x64xf32> to vector<12x64xf32>
    %44 = arith.addf %39, %43 : vector<12x64xf32>
    %45 = math.tanh %44 : vector<12x64xf32>
    %c0_21 = arith.constant 0 : index
    %c0_22 = arith.constant 0 : index
    %46 = vector.load %arg9[%c0_21, %c0_22] : memref<64x128xf32, #tpu.memory_space<vmem>>, vector<64x128xf32>
    %cst_23 = arith.constant dense<0.000000e+00> : vector<12x128xf32>
    %47 = tpu.matmul %45, %46, %cst_23 {dimension_numbers = #tpu.dot_dimension_numbers<[1], [0], [0], [1], [0, 0, 1, 1], [], []>} : vector<12x64xf32>, vector<64x128xf32>, vector<12x128xf32> -> vector<12x128xf32>
    %c0_24 = arith.constant 0 : index
    %c0_25 = arith.constant 0 : index
    %48 = vector.load %arg10[%c0_24, %c0_25] : memref<1x128xf32, #tpu.memory_space<vmem>>, vector<1x128xf32>
    %49 = vector.shape_cast %48 : vector<1x128xf32> to vector<128xf32>
    %50 = vector.shape_cast %49 : vector<128xf32> to vector<1x128xf32>
    %51 = vector.broadcast %50 : vector<1x128xf32> to vector<12x128xf32>
    %52 = arith.addf %47, %51 : vector<12x128xf32>
    %c0_26 = arith.constant 0 : index
    %c0_27 = arith.constant 0 : index
    %53 = memref.load %arg11[%c0_26, %c0_27] : memref<1x1xf32, #tpu.memory_space<smem>>
    %54 = tpu.iota {dimensions = array<i32: 0>} : vector<12x1xi32>
    %c8_i32 = arith.constant 8 : i32
    %55 = arith.muli %arg1, %c8_i32 : i32
    %c2_i32 = arith.constant 2 : i32
    %56 = arith.subi %55, %c2_i32 : i32
    %57 = vector.broadcast %56 : i32 to vector<12x1xi32>
    %58 = arith.addi %54, %57 : vector<12x1xi32>
    %c0_i32 = arith.constant 0 : i32
    %59 = vector.broadcast %c0_i32 : i32 to vector<12x1xi32>
    %60 = arith.cmpi sge, %58, %59 : vector<12x1xi32>
    %c8_i32_28 = arith.constant 8 : i32
    %61 = vector.broadcast %c8_i32_28 : i32 to vector<12x1xi32>
    %62 = arith.cmpi slt, %58, %61 : vector<12x1xi32>
    %63 = arith.andi %60, %62 : vector<12x1xi1>
    %64 = arith.extui %63 : vector<12x1xi1> to vector<12x1xi32>
    %65 = arith.sitofp %64 : vector<12x1xi32> to vector<12x1xf32>
    %cst_29 = arith.constant 0.000000e+00 : f32
    %66 = vector.broadcast %cst_29 : f32 to vector<12x128xf32>
    %67 = arith.cmpf oge, %52, %66 : vector<12x128xf32>
    %68 = vector.broadcast %53 : f32 to vector<12x128xf32>
    %69 = arith.mulf %68, %52 : vector<12x128xf32>
    %70 = arith.select %67, %52, %69 : vector<12x128xi1>, vector<12x128xf32>
    %71 = vector.broadcast %65 : vector<12x1xf32> to vector<12x128xf32>
    %72 = arith.mulf %70, %71 : vector<12x128xf32>
    %73 = vector.extract_strided_slice %72 {offsets = [0, 0], sizes = [8, 128], strides = [1, 1]} : vector<12x128xf32> to vector<8x128xf32>
    %c0_30 = arith.constant 0 : index
    %c0_31 = arith.constant 0 : index
    %74 = vector.load %arg12[%c0_30, %c0_31] : memref<640x64xf32, #tpu.memory_space<vmem>>, vector<128x64xf32>
    %cst_32 = arith.constant dense<0.000000e+00> : vector<8x64xf32>
    %75 = tpu.matmul %73, %74, %cst_32 {dimension_numbers = #tpu.dot_dimension_numbers<[1], [0], [0], [1], [0, 0, 1, 1], [], []>} : vector<8x128xf32>, vector<128x64xf32>, vector<8x64xf32> -> vector<8x64xf32>
    %76 = vector.extract_strided_slice %72 {offsets = [1, 0], sizes = [8, 128], strides = [1, 1]} : vector<12x128xf32> to vector<8x128xf32>
    %c128 = arith.constant 128 : index
    %c0_33 = arith.constant 0 : index
    %77 = vector.load %arg12[%c128, %c0_33] : memref<640x64xf32, #tpu.memory_space<vmem>>, vector<128x64xf32>
    %cst_34 = arith.constant dense<0.000000e+00> : vector<8x64xf32>
    %78 = tpu.matmul %76, %77, %cst_34 {dimension_numbers = #tpu.dot_dimension_numbers<[1], [0], [0], [1], [0, 0, 1, 1], [], []>} : vector<8x128xf32>, vector<128x64xf32>, vector<8x64xf32> -> vector<8x64xf32>
    %79 = arith.addf %75, %78 : vector<8x64xf32>
    %80 = vector.extract_strided_slice %72 {offsets = [2, 0], sizes = [8, 128], strides = [1, 1]} : vector<12x128xf32> to vector<8x128xf32>
    %c256 = arith.constant 256 : index
    %c0_35 = arith.constant 0 : index
    %81 = vector.load %arg12[%c256, %c0_35] : memref<640x64xf32, #tpu.memory_space<vmem>>, vector<128x64xf32>
    %cst_36 = arith.constant dense<0.000000e+00> : vector<8x64xf32>
    %82 = tpu.matmul %80, %81, %cst_36 {dimension_numbers = #tpu.dot_dimension_numbers<[1], [0], [0], [1], [0, 0, 1, 1], [], []>} : vector<8x128xf32>, vector<128x64xf32>, vector<8x64xf32> -> vector<8x64xf32>
    %83 = arith.addf %79, %82 : vector<8x64xf32>
    %84 = vector.extract_strided_slice %72 {offsets = [3, 0], sizes = [8, 128], strides = [1, 1]} : vector<12x128xf32> to vector<8x128xf32>
    %c384 = arith.constant 384 : index
    %c0_37 = arith.constant 0 : index
    %85 = vector.load %arg12[%c384, %c0_37] : memref<640x64xf32, #tpu.memory_space<vmem>>, vector<128x64xf32>
    %cst_38 = arith.constant dense<0.000000e+00> : vector<8x64xf32>
    %86 = tpu.matmul %84, %85, %cst_38 {dimension_numbers = #tpu.dot_dimension_numbers<[1], [0], [0], [1], [0, 0, 1, 1], [], []>} : vector<8x128xf32>, vector<128x64xf32>, vector<8x64xf32> -> vector<8x64xf32>
    %87 = arith.addf %83, %86 : vector<8x64xf32>
    %88 = vector.extract_strided_slice %72 {offsets = [4, 0], sizes = [8, 128], strides = [1, 1]} : vector<12x128xf32> to vector<8x128xf32>
    %c512 = arith.constant 512 : index
    %c0_39 = arith.constant 0 : index
    %89 = vector.load %arg12[%c512, %c0_39] : memref<640x64xf32, #tpu.memory_space<vmem>>, vector<128x64xf32>
    %cst_40 = arith.constant dense<0.000000e+00> : vector<8x64xf32>
    %90 = tpu.matmul %88, %89, %cst_40 {dimension_numbers = #tpu.dot_dimension_numbers<[1], [0], [0], [1], [0, 0, 1, 1], [], []>} : vector<8x128xf32>, vector<128x64xf32>, vector<8x64xf32> -> vector<8x64xf32>
    %91 = arith.addf %87, %90 : vector<8x64xf32>
    %c0_41 = arith.constant 0 : index
    %c0_42 = arith.constant 0 : index
    %92 = vector.load %arg13[%c0_41, %c0_42] : memref<1x64xf32, #tpu.memory_space<vmem>>, vector<1x64xf32>
    %93 = vector.shape_cast %92 : vector<1x64xf32> to vector<64xf32>
    %94 = vector.shape_cast %93 : vector<64xf32> to vector<1x64xf32>
    %95 = vector.broadcast %94 : vector<1x64xf32> to vector<8x64xf32>
    %96 = arith.addf %91, %95 : vector<8x64xf32>
    %c0_43 = arith.constant 0 : index
    %c0_44 = arith.constant 0 : index
    %97 = memref.load %arg14[%c0_43, %c0_44] : memref<1x1xf32, #tpu.memory_space<smem>>
    %cst_45 = arith.constant 0.000000e+00 : f32
    %98 = vector.broadcast %cst_45 : f32 to vector<8x64xf32>
    %99 = arith.cmpf oge, %96, %98 : vector<8x64xf32>
    %100 = vector.broadcast %97 : f32 to vector<8x64xf32>
    %101 = arith.mulf %100, %96 : vector<8x64xf32>
    %102 = arith.select %99, %96, %101 : vector<8x64xi1>, vector<8x64xf32>
    %c0_46 = arith.constant 0 : index
    %c0_47 = arith.constant 0 : index
    %103 = vector.load %arg15[%c0_46, %c0_47] : memref<64x4xf32, #tpu.memory_space<vmem>>, vector<64x4xf32>
    %cst_48 = arith.constant dense<0.000000e+00> : vector<8x4xf32>
    %104 = tpu.matmul %102, %103, %cst_48 {dimension_numbers = #tpu.dot_dimension_numbers<[1], [0], [0], [1], [0, 0, 1, 1], [], []>} : vector<8x64xf32>, vector<64x4xf32>, vector<8x4xf32> -> vector<8x4xf32>
    %c0_49 = arith.constant 0 : index
    %c0_50 = arith.constant 0 : index
    %105 = memref.load %arg16[%c0_49, %c0_50] : memref<1x1xf32, #tpu.memory_space<smem>>
    %106 = vector.broadcast %105 : f32 to vector<8x4xf32>
    %107 = arith.addf %104, %106 : vector<8x4xf32>
    %108 = math.tanh %107 : vector<8x4xf32>
    %c0_51 = arith.constant 0 : index
    %c0_52 = arith.constant 0 : index
    %c0_53 = arith.constant 0 : index
    %109 = vector.load %arg17[%c0_51, %c0_52, %c0_53] : memref<1x8x4xf32, #tpu.memory_space<vmem>>, vector<1x8x4xf32>
    %110 = vector.shape_cast %109 : vector<1x8x4xf32> to vector<8x4xf32>
    %111 = vector.shape_cast %108 : vector<8x4xf32> to vector<1x8x4xf32>
    tpu.vector_store %arg17[%c0_51, %c0_52, %c0_53], %111 {strides = array<i32>} : memref<1x8x4xf32, #tpu.memory_space<vmem>>, vector<1x8x4xf32>,
    return
  }
  func.func @transform_0(%arg0: i32, %arg1: i32) -> (i32, i32, i32, i32) {
    %c0_i32 = arith.constant 0 : i32
    %c0_i32_0 = arith.constant 0 : i32
    %c0_i32_1 = arith.constant 0 : i32
    return %arg0, %arg1, %c0_i32, %c0_i32_0 : i32, i32, i32, i32
  }
  func.func @transform_1(%arg0: i32, %arg1: i32) -> (i32, i32) {
    %c0_i32 = arith.constant 0 : i32
    %c0_i32_0 = arith.constant 0 : i32
    %c0_i32_1 = arith.constant 0 : i32
    return %c0_i32, %c0_i32_0 : i32, i32
  }
  func.func @transform_2(%arg0: i32, %arg1: i32) -> (i32, i32) {
    %c0_i32 = arith.constant 0 : i32
    %c0_i32_0 = arith.constant 0 : i32
    %c0_i32_1 = arith.constant 0 : i32
    return %c0_i32, %c0_i32_0 : i32, i32
  }
  func.func @transform_3(%arg0: i32, %arg1: i32) -> (i32, i32) {
    %c0_i32 = arith.constant 0 : i32
    %c0_i32_0 = arith.constant 0 : i32
    %c0_i32_1 = arith.constant 0 : i32
    return %c0_i32, %c0_i32_0 : i32, i32
  }
  func.func @transform_4(%arg0: i32, %arg1: i32) -> (i32, i32) {
    %c0_i32 = arith.constant 0 : i32
    %c0_i32_0 = arith.constant 0 : i32
    %c0_i32_1 = arith.constant 0 : i32
    return %c0_i32, %c0_i32_0 : i32, i32
  }
  func.func @transform_5(%arg0: i32, %arg1: i32) -> (i32, i32) {
    %c0_i32 = arith.constant 0 : i32
    %c0_i32_0 = arith.constant 0 : i32
    %c0_i32_1 = arith.constant 0 : i32
    return %c0_i32, %c0_i32_0 : i32, i32
  }
  func.func @transform_6(%arg0: i32, %arg1: i32) -> (i32, i32) {
    %c0_i32 = arith.constant 0 : i32
    %c0_i32_0 = arith.constant 0 : i32
    %c0_i32_1 = arith.constant 0 : i32
    return %c0_i32, %c0_i32_0 : i32, i32
  }
  func.func @transform_7(%arg0: i32, %arg1: i32) -> (i32, i32) {
    %c0_i32 = arith.constant 0 : i32
    %c0_i32_0 = arith.constant 0 : i32
    %c0_i32_1 = arith.constant 0 : i32
    return %c0_i32, %c0_i32_0 : i32, i32
  }
  func.func @transform_8(%arg0: i32, %arg1: i32) -> (i32, i32) {
    %c0_i32 = arith.constant 0 : i32
    %c0_i32_0 = arith.constant 0 : i32
    %c0_i32_1 = arith.constant 0 : i32
    return %c0_i32, %c0_i32_0 : i32, i32
  }
  func.func @transform_9(%arg0: i32, %arg1: i32) -> (i32, i32) {
    %c0_i32 = arith.constant 0 : i32
    %c0_i32_0 = arith.constant 0 : i32
    %c0_i32_1 = arith.constant 0 : i32
    return %c0_i32, %c0_i32_0 : i32, i32
  }
  func.func @transform_10(%arg0: i32, %arg1: i32) -> (i32, i32) {
    %c0_i32 = arith.constant 0 : i32
    %c0_i32_0 = arith.constant 0 : i32
    %c0_i32_1 = arith.constant 0 : i32
    return %c0_i32, %c0_i32_0 : i32, i32
  }
  func.func @transform_11(%arg0: i32, %arg1: i32) -> (i32, i32) {
    %c0_i32 = arith.constant 0 : i32
    %c0_i32_0 = arith.constant 0 : i32
    %c0_i32_1 = arith.constant 0 : i32
    return %c0_i32, %c0_i32_0 : i32, i32
  }
  func.func @transform_12(%arg0: i32, %arg1: i32) -> (i32, i32) {
    %c0_i32 = arith.constant 0 : i32
    %c0_i32_0 = arith.constant 0 : i32
    %c0_i32_1 = arith.constant 0 : i32
    return %c0_i32, %c0_i32_0 : i32, i32
  }
  func.func @transform_13(%arg0: i32, %arg1: i32) -> (i32, i32) {
    %c0_i32 = arith.constant 0 : i32
    %c0_i32_0 = arith.constant 0 : i32
    %c0_i32_1 = arith.constant 0 : i32
    return %c0_i32, %c0_i32_0 : i32, i32
  }
  func.func @transform_14(%arg0: i32, %arg1: i32) -> (i32, i32) {
    %c0_i32 = arith.constant 0 : i32
    %c0_i32_0 = arith.constant 0 : i32
    %c0_i32_1 = arith.constant 0 : i32
    return %c0_i32, %c0_i32_0 : i32, i32
  }
  func.func @transform_15(%arg0: i32, %arg1: i32) -> (i32, i32, i32) {
    %c0_i32 = arith.constant 0 : i32
    %c0_i32_0 = arith.constant 0 : i32
    return %arg0, %arg1, %c0_i32 : i32, i32, i32
  }
}

</mosaic_0001>

<llo_original>
// kernel: _lambda_.1
$region0: #{_lambda_.1}
  #allocation0 [shape = 'u32[]', space=smem, size = 0x4, offset = 0x4, fixed_abs, tag = 'smem constant byte address 0x4 - core index']
  #allocation1 [shape = 'u32[144,128]{1,0:T(1,128)}', space=vmem, size = 0x12000, scoped, tag = 'internal scratch']
  #allocation2 [shape = 'f32[1,1]{1,0:T(1,128)S(6)}', space=smem, size = 0x200, scoped, tag = 'scoped memory for _lambda_.1']
  #allocation3 [shape = 'f32[1,1]{1,0:T(1,128)S(6)}', space=smem, size = 0x200, scoped, tag = 'scoped memory for _lambda_.1']
  #allocation4 [shape = 'f32[1,1]{1,0:T(1,128)S(6)}', space=smem, size = 0x200, scoped, tag = 'scoped memory for _lambda_.1']
  %s0 = inlined_call_operand.vmem [shape: f32[2,1,12,40], index: 0, kind: input, shape index: {}]
  %s1 = inlined_call_operand.vmem [shape: f32[40,32], index: 1, kind: input, shape index: {}]
  %s2 = inlined_call_operand.vmem [shape: f32[1,32], index: 2, kind: input, shape index: {}]
  %s3 = inlined_call_operand.vmem [shape: f32[1,32], index: 3, kind: input, shape index: {}]
  %s4 = inlined_call_operand.vmem [shape: f32[1,32], index: 4, kind: input, shape index: {}]
  %s5 = inlined_call_operand.vmem [shape: f32[32,64], index: 5, kind: input, shape index: {}]
  %s6 = inlined_call_operand.vmem [shape: f32[1,64], index: 6, kind: input, shape index: {}]
  %s7 = inlined_call_operand.vmem [shape: f32[64,128], index: 7, kind: input, shape index: {}]
  %s8 = inlined_call_operand.vmem [shape: f32[1,128], index: 8, kind: input, shape index: {}]
  %s9 = inlined_call_operand.<no memory space> [shape: f32[1,1], index: 9, kind: input, shape index: {}, may-alias: {9,12}]
  %s10 = inlined_call_operand.hbm [shape: f32[640,64], index: 10, kind: input, shape index: {}]
  %s11 = inlined_call_operand.vmem [shape: f32[1,64], index: 11, kind: input, shape index: {}]
  %s12 = inlined_call_operand.<no memory space> [shape: f32[1,1], index: 12, kind: input, shape index: {}, may-alias: {9,12}]
  %s13 = inlined_call_operand.vmem [shape: f32[64,4], index: 13, kind: input, shape index: {}]
  %s14 = inlined_call_operand.<no memory space> [shape: f32[1,1], index: 14, kind: input, shape index: {}]
  %s15 = inlined_call_operand.vmem [shape: f32[2,8,4], index: 15, kind: output, shape index: {}]
  %s16 = sld [smem:[#allocation0]]
  $region97: #{_lambda_.1} parent=0
    _
  %s18 = ssub.s32 1, %s16
  %s19 = scalar_select 0, %s18, %s16
  %20 = sst [smem:[#allocation2]] %s9
  %21 = sst [smem:[#allocation3]] %s12
  %22 = sst [smem:[#allocation4]] %s14
  $region1: #{_lambda_.1} parent=0
    #allocation5 [shape = 'u8[327680]{0}', space=vmem, size = 0x50000, scoped, tag = 'input window, operand 10, single buffered']
    #allocation6 [shape = 's32[2]{0}', space=sflag, size = 0x8, scoped, tag = 'scoped memory for _lambda_.1']
    %23 = vsyncpa [#allocation6], 0
    loop: start=0, step=1, limit=4
    $region2: #{_lambda_.1} parent=1 // loop_pre_header
      _
    $region3: #{_lambda_.1} parent=1 // loop_header
      %s25 = sphi 0, %s29
      %p26 = scmp.ge.s32.totalorder %s25, 4
      %s32 = sphi 0, %s44
      %s33 = sphi 0, %s40
      %s34 = sphi 0, %s32
      %s35 = sphi 0, %s33
      %s36 = sphi 0, %s34
      %s37 = sphi 0, %s35
      %s49 = sphi 0, %s51
      %s52 = sphi 0, %s49
      %s53 = sphi 0, %s52
      %s69 = sphi 0, %s53
      %s73 = sphi 0, %s73
      %s75 = sphi 0, %s73
      %s76 = sphi 0, %s75
      %s90 = sphi 0, %s76
      %s94 = sphi 0, %s94
      %s96 = sphi 0, %s94
      %s97 = sphi 0, %s96
      %s111 = sphi 0, %s97
      %s115 = sphi 0, %s115
      %s117 = sphi 0, %s115
      %s118 = sphi 0, %s117
      %s132 = sphi 0, %s118
      %s136 = sphi 0, %s136
      %s138 = sphi 0, %s136
      %s139 = sphi 0, %s138
      %s153 = sphi 0, %s139
      %s157 = sphi 0, %s157
      %s159 = sphi 0, %s157
      %s160 = sphi 0, %s159
      %s174 = sphi 0, %s160
      %s178 = sphi 0, %s178
      %s180 = sphi 0, %s178
      %s181 = sphi 0, %s180
      %s195 = sphi 0, %s181
      %s199 = sphi 0, %s199
      %s201 = sphi 0, %s199
      %s202 = sphi 0, %s201
      %s216 = sphi 0, %s202
      %s220 = sphi 0, %s220
      %s222 = sphi 0, %s220
      %s223 = sphi 0, %s222
      %s237 = sphi 0, %s223
      %s241 = sphi 0, %s241
      %s243 = sphi 0, %s241
      %s244 = sphi 0, %s243
      %s258 = sphi 0, %s244
      %s262 = sphi 0, %s262
      %s264 = sphi 0, %s262
      %s265 = sphi 0, %s264
      %s279 = sphi 0, %s265
      %s283 = sphi 0, %s283
      %s285 = sphi 0, %s283
      %s286 = sphi 0, %s285
      %s300 = sphi 0, %s286
      %s304 = sphi 0, %s304
      %s306 = sphi 0, %s304
      %s307 = sphi 0, %s306
      %s321 = sphi 0, %s307
      %s325 = sphi 0, %s325
      %s327 = sphi 0, %s325
      %s328 = sphi 0, %s327
      %s342 = sphi 0, %s328
      %s346 = sphi 0, %s346
      %s348 = sphi 0, %s346
      %s349 = sphi 0, %s348
      %s363 = sphi 0, %s349
      %s371 = sphi 0, %s373
      %s374 = sphi 0, %s371
      %s375 = sphi 0, %s374
      %s391 = sphi 0, %s375
    $region4: #{_lambda_.1} parent=1 // loop_header_branch
      %28 = sbr.rel (%p26) target = $region8
    $region5: #{_lambda_.1} parent=1 // loop_body
      %s30 = ssub.s32 %s25, 1
      %s31 = ssub.s32 %s25, 2
      %s38 = sadd.s32 1, %s33
      %p39 = scmp.ge.s32.totalorder %s38, 1
      %s40 = scalar_select %p39, 0, %s38
      %s41 = sadd.s32 1, %s32
      %s42 = scalar_select %p39, %s41, %s32
      %p43 = scmp.ge.s32.totalorder %s42, 2
      %s44 = scalar_select %p43, 0, %s42
      %s45 = ssub.s32 %s32, %s44
      %s46 = ssub.s32 %s33, %s40
      %s47 = sor.u32 %s45, %s46
      %p48 = scmp.eq.s32.totalorder %s47, 0
      %s50 = sadd.s32 %s49, 1
      %s51 = scalar_select %p48, %s49, %s50
      %p54 = pneg %p48
      %p55 = scmp.eq.s32.totalorder %s25, 1
      %p56 = por %p54, %p55
      %p57 = scmp.ne.s32.totalorder %s49, %s52
      %p58 = scmp.eq.s32.totalorder %s25, 0
      %p59 = por %p57, %p58
      %p60 = scmp.ne.s32.totalorder %s49, %s52
      %p61 = scmp.eq.s32.totalorder %s30, 1
      %p62 = por %p60, %p61
      %p63 = scmp.ne.s32.totalorder %s52, %s53
      %p64 = scmp.eq.s32.totalorder %s30, 0
      %p65 = por %p63, %p64
      %p66 = scmp.ne.s32.totalorder %s52, %s53
      %p67 = scmp.eq.s32.totalorder %s31, 1
      %p68 = por %p66, %p67
      %p70 = scmp.ne.s32.totalorder %s53, %s69
      %p71 = scmp.eq.s32.totalorder %s31, 0
      %p72 = por %p70, %p71
      %s74 = sadd.s32 %s73, 1
      %p77 = scmp.eq.s32.totalorder %s25, 1
      %p78 = scmp.ne.s32.totalorder %s73, %s75
      %p79 = scmp.eq.s32.totalorder %s25, 0
      %p80 = por %p78, %p79
      %p81 = scmp.ne.s32.totalorder %s73, %s75
      %p82 = scmp.eq.s32.totalorder %s30, 1
      %p83 = por %p81, %p82
      %p84 = scmp.ne.s32.totalorder %s75, %s76
      %p85 = scmp.eq.s32.totalorder %s30, 0
      %p86 = por %p84, %p85
      %p87 = scmp.ne.s32.totalorder %s75, %s76
      %p88 = scmp.eq.s32.totalorder %s31, 1
      %p89 = por %p87, %p88
      %p91 = scmp.ne.s32.totalorder %s76, %s90
      %p92 = scmp.eq.s32.totalorder %s31, 0
      %p93 = por %p91, %p92
      %s95 = sadd.s32 %s94, 1
      %p98 = scmp.eq.s32.totalorder %s25, 1
      %p99 = scmp.ne.s32.totalorder %s94, %s96
      %p100 = scmp.eq.s32.totalorder %s25, 0
      %p101 = por %p99, %p100
      %p102 = scmp.ne.s32.totalorder %s94, %s96
      %p103 = scmp.eq.s32.totalorder %s30, 1
      %p104 = por %p102, %p103
      %p105 = scmp.ne.s32.totalorder %s96, %s97
      %p106 = scmp.eq.s32.totalorder %s30, 0
      %p107 = por %p105, %p106
      %p108 = scmp.ne.s32.totalorder %s96, %s97
      %p109 = scmp.eq.s32.totalorder %s31, 1
      %p110 = por %p108, %p109
      %p112 = scmp.ne.s32.totalorder %s97, %s111
      %p113 = scmp.eq.s32.totalorder %s31, 0
      %p114 = por %p112, %p113
      %s116 = sadd.s32 %s115, 1
      %p119 = scmp.eq.s32.totalorder %s25, 1
      %p120 = scmp.ne.s32.totalorder %s115, %s117
      %p121 = scmp.eq.s32.totalorder %s25, 0
      %p122 = por %p120, %p121
      %p123 = scmp.ne.s32.totalorder %s115, %s117
      %p124 = scmp.eq.s32.totalorder %s30, 1
      %p125 = por %p123, %p124
      %p126 = scmp.ne.s32.totalorder %s117, %s118
      %p127 = scmp.eq.s32.totalorder %s30, 0
      %p128 = por %p126, %p127
      %p129 = scmp.ne.s32.totalorder %s117, %s118
      %p130 = scmp.eq.s32.totalorder %s31, 1
      %p131 = por %p129, %p130
      %p133 = scmp.ne.s32.totalorder %s118, %s132
      %p134 = scmp.eq.s32.totalorder %s31, 0
      %p135 = por %p133, %p134
      %s137 = sadd.s32 %s136, 1
      %p140 = scmp.eq.s32.totalorder %s25, 1
      %p141 = scmp.ne.s32.totalorder %s136, %s138
      %p142 = scmp.eq.s32.totalorder %s25, 0
      %p143 = por %p141, %p142
      %p144 = scmp.ne.s32.totalorder %s136, %s138
      %p145 = scmp.eq.s32.totalorder %s30, 1
      %p146 = por %p144, %p145
      %p147 = scmp.ne.s32.totalorder %s138, %s139
      %p148 = scmp.eq.s32.totalorder %s30, 0
      %p149 = por %p147, %p148
      %p150 = scmp.ne.s32.totalorder %s138, %s139
      %p151 = scmp.eq.s32.totalorder %s31, 1
      %p152 = por %p150, %p151
      %p154 = scmp.ne.s32.totalorder %s139, %s153
      %p155 = scmp.eq.s32.totalorder %s31, 0
      %p156 = por %p154, %p155
      %s158 = sadd.s32 %s157, 1
      %p161 = scmp.eq.s32.totalorder %s25, 1
      %p162 = scmp.ne.s32.totalorder %s157, %s159
      %p163 = scmp.eq.s32.totalorder %s25, 0
      %p164 = por %p162, %p163
      %p165 = scmp.ne.s32.totalorder %s157, %s159
      %p166 = scmp.eq.s32.totalorder %s30, 1
      %p167 = por %p165, %p166
      %p168 = scmp.ne.s32.totalorder %s159, %s160
      %p169 = scmp.eq.s32.totalorder %s30, 0
      %p170 = por %p168, %p169
      %p171 = scmp.ne.s32.totalorder %s159, %s160
      %p172 = scmp.eq.s32.totalorder %s31, 1
      %p173 = por %p171, %p172
      %p175 = scmp.ne.s32.totalorder %s160, %s174
      %p176 = scmp.eq.s32.totalorder %s31, 0
      %p177 = por %p175, %p176
      %s179 = sadd.s32 %s178, 1
      %p182 = scmp.eq.s32.totalorder %s25, 1
      %p183 = scmp.ne.s32.totalorder %s178, %s180
      %p184 = scmp.eq.s32.totalorder %s25, 0
      %p185 = por %p183, %p184
      %p186 = scmp.ne.s32.totalorder %s178, %s180
      %p187 = scmp.eq.s32.totalorder %s30, 1
      %p188 = por %p186, %p187
      %p189 = scmp.ne.s32.totalorder %s180, %s181
      %p190 = scmp.eq.s32.totalorder %s30, 0
      %p191 = por %p189, %p190
      %p192 = scmp.ne.s32.totalorder %s180, %s181
      %p193 = scmp.eq.s32.totalorder %s31, 1
      %p194 = por %p192, %p193
      %p196 = scmp.ne.s32.totalorder %s181, %s195
      %p197 = scmp.eq.s32.totalorder %s31, 0
      %p198 = por %p196, %p197
      %s200 = sadd.s32 %s199, 1
      %p203 = scmp.eq.s32.totalorder %s25, 1
      %p204 = scmp.ne.s32.totalorder %s199, %s201
      %p205 = scmp.eq.s32.totalorder %s25, 0
      %p206 = por %p204, %p205
      %p207 = scmp.ne.s32.totalorder %s199, %s201
      %p208 = scmp.eq.s32.totalorder %s30, 1
      %p209 = por %p207, %p208
      %p210 = scmp.ne.s32.totalorder %s201, %s202
      %p211 = scmp.eq.s32.totalorder %s30, 0
      %p212 = por %p210, %p211
      %p213 = scmp.ne.s32.totalorder %s201, %s202
      %p214 = scmp.eq.s32.totalorder %s31, 1
      %p215 = por %p213, %p214
      %p217 = scmp.ne.s32.totalorder %s202, %s216
      %p218 = scmp.eq.s32.totalorder %s31, 0
      %p219 = por %p217, %p218
      %s221 = sadd.s32 %s220, 1
      %p224 = scmp.eq.s32.totalorder %s25, 1
      %p225 = scmp.ne.s32.totalorder %s220, %s222
      %p226 = scmp.eq.s32.totalorder %s25, 0
      %p227 = por %p225, %p226
      %p228 = scmp.ne.s32.totalorder %s220, %s222
      %p229 = scmp.eq.s32.totalorder %s30, 1
      %p230 = por %p228, %p229
      %p231 = scmp.ne.s32.totalorder %s222, %s223
      %p232 = scmp.eq.s32.totalorder %s30, 0
      %p233 = por %p231, %p232
      %p234 = scmp.ne.s32.totalorder %s222, %s223
      %p235 = scmp.eq.s32.totalorder %s31, 1
      %p236 = por %p234, %p235
      %p238 = scmp.ne.s32.totalorder %s223, %s237
      %p239 = scmp.eq.s32.totalorder %s31, 0
      %p240 = por %p238, %p239
      %s242 = sadd.s32 %s241, 1
      %p245 = scmp.eq.s32.totalorder %s25, 1
      %p246 = scmp.ne.s32.totalorder %s241, %s243
      %p247 = scmp.eq.s32.totalorder %s25, 0
      %p248 = por %p246, %p247
      %p249 = scmp.ne.s32.totalorder %s241, %s243
      %p250 = scmp.eq.s32.totalorder %s30, 1
      %p251 = por %p249, %p250
      %p252 = scmp.ne.s32.totalorder %s243, %s244
      %p253 = scmp.eq.s32.totalorder %s30, 0
      %p254 = por %p252, %p253
      %p255 = scmp.ne.s32.totalorder %s243, %s244
      %p256 = scmp.eq.s32.totalorder %s31, 1
      %p257 = por %p255, %p256
      %p259 = scmp.ne.s32.totalorder %s244, %s258
      %p260 = scmp.eq.s32.totalorder %s31, 0
      %p261 = por %p259, %p260
      %s263 = sadd.s32 %s262, 1
      %p266 = scmp.eq.s32.totalorder %s25, 1
      %p267 = scmp.ne.s32.totalorder %s262, %s264
      %p268 = scmp.eq.s32.totalorder %s25, 0
      %p269 = por %p267, %p268
      %p270 = scmp.ne.s32.totalorder %s262, %s264
      %p271 = scmp.eq.s32.totalorder %s30, 1
      %p272 = por %p270, %p271
      %p273 = scmp.ne.s32.totalorder %s264, %s265
      %p274 = scmp.eq.s32.totalorder %s30, 0
      %p275 = por %p273, %p274
      %p276 = scmp.ne.s32.totalorder %s264, %s265
      %p277 = scmp.eq.s32.totalorder %s31, 1
      %p278 = por %p276, %p277
      %p280 = scmp.ne.s32.totalorder %s265, %s279
      %p281 = scmp.eq.s32.totalorder %s31, 0
      %p282 = por %p280, %p281
      %s284 = sadd.s32 %s283, 1
      %p287 = scmp.eq.s32.totalorder %s25, 1
      %p288 = scmp.ne.s32.totalorder %s283, %s285
      %p289 = scmp.eq.s32.totalorder %s25, 0
      %p290 = por %p288, %p289
      %p291 = scmp.ne.s32.totalorder %s283, %s285
      %p292 = scmp.eq.s32.totalorder %s30, 1
      %p293 = por %p291, %p292
      %p294 = scmp.ne.s32.totalorder %s285, %s286
      %p295 = scmp.eq.s32.totalorder %s30, 0
      %p296 = por %p294, %p295
      %p297 = scmp.ne.s32.totalorder %s285, %s286
      %p298 = scmp.eq.s32.totalorder %s31, 1
      %p299 = por %p297, %p298
      %p301 = scmp.ne.s32.totalorder %s286, %s300
      %p302 = scmp.eq.s32.totalorder %s31, 0
      %p303 = por %p301, %p302
      %s305 = sadd.s32 %s304, 1
      %p308 = scmp.eq.s32.totalorder %s25, 1
      %p309 = scmp.ne.s32.totalorder %s304, %s306
      %p310 = scmp.eq.s32.totalorder %s25, 0
      %p311 = por %p309, %p310
      %p312 = scmp.ne.s32.totalorder %s304, %s306
      %p313 = scmp.eq.s32.totalorder %s30, 1
      %p314 = por %p312, %p313
      %p315 = scmp.ne.s32.totalorder %s306, %s307
      %p316 = scmp.eq.s32.totalorder %s30, 0
      %p317 = por %p315, %p316
      %p318 = scmp.ne.s32.totalorder %s306, %s307
      %p319 = scmp.eq.s32.totalorder %s31, 1
      %p320 = por %p318, %p319
      %p322 = scmp.ne.s32.totalorder %s307, %s321
      %p323 = scmp.eq.s32.totalorder %s31, 0
      %p324 = por %p322, %p323
      %s326 = sadd.s32 %s325, 1
      %p329 = scmp.eq.s32.totalorder %s25, 1
      %p330 = scmp.ne.s32.totalorder %s325, %s327
      %p331 = scmp.eq.s32.totalorder %s25, 0
      %p332 = por %p330, %p331
      %p333 = scmp.ne.s32.totalorder %s325, %s327
      %p334 = scmp.eq.s32.totalorder %s30, 1
      %p335 = por %p333, %p334
      %p336 = scmp.ne.s32.totalorder %s327, %s328
      %p337 = scmp.eq.s32.totalorder %s30, 0
      %p338 = por %p336, %p337
      %p339 = scmp.ne.s32.totalorder %s327, %s328
      %p340 = scmp.eq.s32.totalorder %s31, 1
      %p341 = por %p339, %p340
      %p343 = scmp.ne.s32.totalorder %s328, %s342
      %p344 = scmp.eq.s32.totalorder %s31, 0
      %p345 = por %p343, %p344
      %s347 = sadd.s32 %s346, 1
      %p350 = scmp.eq.s32.totalorder %s25, 1
      %p351 = scmp.ne.s32.totalorder %s346, %s348
      %p352 = scmp.eq.s32.totalorder %s25, 0
      %p353 = por %p351, %p352
      %p354 = scmp.ne.s32.totalorder %s346, %s348
      %p355 = scmp.eq.s32.totalorder %s30, 1
      %p356 = por %p354, %p355
      %p357 = scmp.ne.s32.totalorder %s348, %s349
      %p358 = scmp.eq.s32.totalorder %s30, 0
      %p359 = por %p357, %p358
      %p360 = scmp.ne.s32.totalorder %s348, %s349
      %p361 = scmp.eq.s32.totalorder %s31, 1
      %p362 = por %p360, %p361
      %p364 = scmp.ne.s32.totalorder %s349, %s363
      %p365 = scmp.eq.s32.totalorder %s31, 0
      %p366 = por %p364, %p365
      %s367 = ssub.s32 %s32, %s44
      %s368 = ssub.s32 %s33, %s40
      %s369 = sor.u32 %s367, %s368
      %p370 = scmp.eq.s32.totalorder %s369, 0
      %s372 = sadd.s32 %s371, 1
      %s373 = scalar_select %p370, %s371, %s372
      %p376 = pneg %p370
      %p377 = scmp.eq.s32.totalorder %s25, 1
      %p378 = por %p376, %p377
      %p379 = scmp.ne.s32.totalorder %s371, %s374
      %p380 = scmp.eq.s32.totalorder %s25, 0
      %p381 = por %p379, %p380
      %p382 = scmp.ne.s32.totalorder %s371, %s374
      %p383 = scmp.eq.s32.totalorder %s30, 1
      %p384 = por %p382, %p383
      %p385 = scmp.ne.s32.totalorder %s374, %s375
      %p386 = scmp.eq.s32.totalorder %s30, 0
      %p387 = por %p385, %p386
      %p388 = scmp.ne.s32.totalorder %s374, %s375
      %p389 = scmp.eq.s32.totalorder %s31, 1
      %p390 = por %p388, %p389
      %p392 = scmp.ne.s32.totalorder %s375, %s391
      %p393 = scmp.eq.s32.totalorder %s31, 0
      %p394 = por %p392, %p393
      %p395 = scmp.le.s32.totalorder 1, %s25
      %p396 = scmp.lt.s32.totalorder %s25, 3
      %p397 = pnand %p395, %p396
      %p398 = pneg %p397
      // Predicated region
      $region9: #{_lambda_.1} parent=5 // pred_check
        _
      $region10: #{_lambda_.1} parent=5 // pred_check_branch
        %400 = sbr.rel (%p397) target = $region12
      $region11: #{_lambda_.1} parent=5 // pred_region
        %s401 = ssub.s32 %s25, 1
        // Predicated region
        $region13: #{_lambda_.1} parent=11 // pred_check
          %p402 = pneg %p86
        $region14: #{_lambda_.1} parent=11 // pred_check_branch
          %404 = sbr.rel (%p402) target = $region16
        $region15: #{_lambda_.1} parent=11 // pred_region
          _
        $region16: #{_lambda_.1} parent=11 // pred_fallthru
          _
        // Predicated region
        $region17: #{_lambda_.1} parent=11 // pred_check
          %p405 = pneg %p107
        $region18: #{_lambda_.1} parent=11 // pred_check_branch
          %407 = sbr.rel (%p405) target = $region20
        $region19: #{_lambda_.1} parent=11 // pred_region
          _
        $region20: #{_lambda_.1} parent=11 // pred_fallthru
          _
        // Predicated region
        $region21: #{_lambda_.1} parent=11 // pred_check
          %p408 = pneg %p128
        $region22: #{_lambda_.1} parent=11 // pred_check_branch
          %410 = sbr.rel (%p408) target = $region24
        $region23: #{_lambda_.1} parent=11 // pred_region
          _
        $region24: #{_lambda_.1} parent=11 // pred_fallthru
          _
        // Predicated region
        $region25: #{_lambda_.1} parent=11 // pred_check
          %p411 = pneg %p149
        $region26: #{_lambda_.1} parent=11 // pred_check_branch
          %413 = sbr.rel (%p411) target = $region28
        $region27: #{_lambda_.1} parent=11 // pred_region
          _
        $region28: #{_lambda_.1} parent=11 // pred_fallthru
          _
        // Predicated region
        $region29: #{_lambda_.1} parent=11 // pred_check
          %p414 = pneg %p170
        $region30: #{_lambda_.1} parent=11 // pred_check_branch
          %416 = sbr.rel (%p414) target = $region32
        $region31: #{_lambda_.1} parent=11 // pred_region
          _
        $region32: #{_lambda_.1} parent=11 // pred_fallthru
          _
        // Predicated region
        $region33: #{_lambda_.1} parent=11 // pred_check
          %p417 = pneg %p191
        $region34: #{_lambda_.1} parent=11 // pred_check_branch
          %419 = sbr.rel (%p417) target = $region36
        $region35: #{_lambda_.1} parent=11 // pred_region
          _
        $region36: #{_lambda_.1} parent=11 // pred_fallthru
          _
        // Predicated region
        $region37: #{_lambda_.1} parent=11 // pred_check
          %p420 = pneg %p212
        $region38: #{_lambda_.1} parent=11 // pred_check_branch
          %422 = sbr.rel (%p420) target = $region40
        $region39: #{_lambda_.1} parent=11 // pred_region
          _
        $region40: #{_lambda_.1} parent=11 // pred_fallthru
          _
        // Predicated region
        $region41: #{_lambda_.1} parent=11 // pred_check
          %p423 = pneg %p233
        $region42: #{_lambda_.1} parent=11 // pred_check_branch
          %425 = sbr.rel (%p423) target = $region44
        $region43: #{_lambda_.1} parent=11 // pred_region
          _
        $region44: #{_lambda_.1} parent=11 // pred_fallthru
          _
        // Predicated region
        $region45: #{_lambda_.1} parent=11 // pred_check
          %p426 = pneg %p254
        $region46: #{_lambda_.1} parent=11 // pred_check_branch
          %428 = sbr.rel (%p426) target = $region48
        $region47: #{_lambda_.1} parent=11 // pred_region
          _
        $region48: #{_lambda_.1} parent=11 // pred_fallthru
          _
        // Predicated region
        $region49: #{_lambda_.1} parent=11 // pred_check
          %p429 = pneg %p275
        $region50: #{_lambda_.1} parent=11 // pred_check_branch
          %431 = sbr.rel (%p429) target = $region52
        $region51: #{_lambda_.1} parent=11 // pred_region
          %s433 = ssub.s32 10240, 10240
          %434 = vsyncadd [#allocation6], %s433
          %s435 = sshll.u32 [#allocation5], 4
          %s436 = int_to_ptr.vmem [resolvable:$true] %s435
          %441 = dma.hbm_to_vmem [thread:$0]  %s10, 10240, %s436, [#allocation6], 128, 128, 8
        $region52: #{_lambda_.1} parent=11 // pred_fallthru
          _
        // Predicated region
        $region53: #{_lambda_.1} parent=11 // pred_check
          %p442 = pneg %p296
        $region54: #{_lambda_.1} parent=11 // pred_check_branch
          %444 = sbr.rel (%p442) target = $region56
        $region55: #{_lambda_.1} parent=11 // pred_region
          _
        $region56: #{_lambda_.1} parent=11 // pred_fallthru
          _
        // Predicated region
        $region57: #{_lambda_.1} parent=11 // pred_check
          %p445 = pneg %p317
        $region58: #{_lambda_.1} parent=11 // pred_check_branch
          %447 = sbr.rel (%p445) target = $region60
        $region59: #{_lambda_.1} parent=11 // pred_region
          _
        $region60: #{_lambda_.1} parent=11 // pred_fallthru
          _
        // Predicated region
        $region61: #{_lambda_.1} parent=11 // pred_check
          %p448 = pneg %p338
        $region62: #{_lambda_.1} parent=11 // pred_check_branch
          %450 = sbr.rel (%p448) target = $region64
        $region63: #{_lambda_.1} parent=11 // pred_region
          _
        $region64: #{_lambda_.1} parent=11 // pred_fallthru
          _
        // Predicated region
        $region65: #{_lambda_.1} parent=11 // pred_check
          %p451 = pneg %p359
        $region66: #{_lambda_.1} parent=11 // pred_check_branch
          %453 = sbr.rel (%p451) target = $region68
        $region67: #{_lambda_.1} parent=11 // pred_region
          _
        $region68: #{_lambda_.1} parent=11 // pred_fallthru
          _
      $region12: #{_lambda_.1} parent=5 // pred_fallthru
        _
      %p454 = scmp.lt.s32.totalorder %s25, 2
      // Predicated region
      $region69: #{_lambda_.1} parent=5 // pred_check
        %p455 = pneg %p454
      $region70: #{_lambda_.1} parent=5 // pred_check_branch
        %457 = sbr.rel (%p455) target = $region72
      $region71: #{_lambda_.1} parent=5 // pred_region
        // Predicated region
        $region73: #{_lambda_.1} parent=71 // pred_check
          %p458 = pneg %p59
        $region74: #{_lambda_.1} parent=71 // pred_check_branch
          %460 = sbr.rel (%p458) target = $region76
        $region75: #{_lambda_.1} parent=71 // pred_region
          %p461 = scmp.lt.s32.totalorder %s32, 1
          %s462 = scalar_select %p461, %s32, 1
          %p463 = scmp.lt.s32.totalorder %s33, 0
          %s464 = scalar_select %p463, %s33, 0
          %s465 = smul.addr %s464, 2
          %s466 = smul.addr %s462, 2
          %s467 = sadd.s32 %s465, %s466
          %s468 = smul.addr %s467, 8
          %s469 = scalar_lea.vmem %s0, %s468
        $region76: #{_lambda_.1} parent=71 // pred_fallthru
          _
      $region72: #{_lambda_.1} parent=5 // pred_fallthru
        _
      %p470 = scmp.le.s32.totalorder 1, %s25
      %p471 = scmp.lt.s32.totalorder %s25, 3
      %p472 = pnand %p470, %p471
      %p473 = pneg %p472
      // Predicated region
      $region77: #{_lambda_.1} parent=5 // pred_check
        _
      $region78: #{_lambda_.1} parent=5 // pred_check_branch
        %475 = sbr.rel (%p472) target = $region80
      $region79: #{_lambda_.1} parent=5 // pred_region
        %s476 = ssub.s32 %s25, 1
        // Predicated region
        $region81: #{_lambda_.1} parent=79 // pred_check
          %p477 = pneg %p275
        $region82: #{_lambda_.1} parent=79 // pred_check_branch
          %479 = sbr.rel (%p477) target = $region84
        $region83: #{_lambda_.1} parent=79 // pred_region
          %480 = dma.done [#allocation6], 10240
        $region84: #{_lambda_.1} parent=79 // pred_fallthru
          _
        %p481 = scmp.lt.s32.totalorder %s34, 1
        %s482 = scalar_select %p481, %s34, 1
        %p483 = scmp.lt.s32.totalorder %s35, 0
        %s484 = scalar_select %p483, %s35, 0
        %s485 = smul.addr %s484, 2
        %s486 = smul.addr %s482, 2
        %s487 = sadd.s32 %s485, %s486
        %s488 = smul.addr %s487, 8
        %s489 = scalar_lea.vmem %s0, %s488
        %p490 = pneg %p65
        %p491 = pneg %p62
        %p492 = pneg %p86
        %p493 = pneg %p83
        %p494 = pneg %p107
        %p495 = pneg %p104
        %p496 = pneg %p128
        %p497 = pneg %p125
        %p498 = pneg %p149
        %p499 = pneg %p146
        %p500 = pneg %p170
        %p501 = pneg %p167
        %p502 = pneg %p191
        %p503 = pneg %p188
        %p504 = pneg %p212
        %p505 = pneg %p209
        %p506 = pneg %p233
        %p507 = pneg %p230
        %p508 = pneg %p254
        %p509 = pneg %p251
        %p510 = pneg %p275
        %p511 = pneg %p272
        %p512 = pneg %p296
        %p513 = pneg %p293
        %p514 = pneg %p317
        %p515 = pneg %p314
        %p516 = pneg %p338
        %p517 = pneg %p335
        %p518 = pneg %p359
        %p519 = pneg %p356
        %p520 = pneg %p387
        %p521 = pneg %p384
        %p522 = scmp.lt.s32.totalorder %s34, 1
        %s523 = scalar_select %p522, %s34, 1
        %p524 = scmp.lt.s32.totalorder %s35, 0
        %s525 = scalar_select %p524, %s35, 0
        %s526 = sadd.s32 %s525, %s523
        %s527 = smul.addr %s526, 8
        %s528 = scalar_lea.vmem %s15, %s527
        %p529 = scmp.lt.s32.totalorder %s34, 1
        %s530 = scalar_select %p529, %s34, 1
        %p531 = scmp.lt.s32.totalorder %s35, 0
        %s532 = scalar_select %p531, %s35, 0
        %s533 = smul.addr %s532, 2
        %s534 = smul.addr %s530, 2
        %s535 = sadd.s32 %s533, %s534
        %s536 = smul.addr %s535, 8
        %s537 = scalar_lea.vmem %s0, %s536
        %p538 = scmp.lt.s32.totalorder %s34, 1
        %s539 = scalar_select %p538, %s34, 1
        %p540 = scmp.lt.s32.totalorder %s35, 0
        %s541 = scalar_select %p540, %s35, 0
        %s542 = sadd.s32 %s541, %s539
        %s543 = smul.addr %s542, 8
        %s544 = scalar_lea.vmem %s15, %s543
        %v545 = vld [vmem:[%s537] sm:$0xff]
        %v546 = vld [vmem:[%s537 + $0x8] sm:$0xf]
        %v547 = vld [vmem:[%s1] sm:$0xff]
        %v548 = vld [vmem:[%s1 + $0x8] sm:$0xff]
        %v549 = vld [vmem:[%s1 + $0x10] sm:$0xff]
        %v550 = vld [vmem:[%s1 + $0x18] sm:$0xff]
        %v551 = vld [vmem:[%s1 + $0x20] sm:$0xff]
        %v552 = vld [vmem:[%s2] sm:$0x1]
        %v554 = vlaneseq
        %v555 = vshrl.u32 %v554, 7
        %v556 = vsub.s32 0, %v555
        %v557 = vrot.slane %v552, %v556
        %vm559 = vcmask 326656
        %v561 = vsel %vm559, %v545, 0
        %v564 = vsel %vm559, %v546, 0
        %566 = vmatprep.subr.mxu0 0.0
        %567 = vmatpush1.msra.mxu0 %v547
        %568 = vmatprep.subr.mxu0 0.0
        %569 = vmatpush1.msra.mxu0 %v548
        %570 = vmatprep.subr.mxu0 0.0
        %571 = vmatpush1.msra.mxu0 %v549
        %572 = vmatprep.subr.mxu0 0.0
        %573 = vmatpush1.msra.mxu0 %v550
        %574 = vmatprep.subr.mxu0 0.0
        %575 = vmatpush1.msra.mxu0 %v551
        %576 = vmatprep.subr.mxu0 0.0
        %577 = vmatpush1.msra.mxu0 0.0
        %578 = vmatprep.subr.mxu0 0.0
        %579 = vmatpush1.msra.mxu0 0.0
        %580 = vmatprep.subr.mxu0 0.0
        %581 = vmatpush1.msra.mxu0 0.0
        %582 = vmatprep.subr.mxu0 0.0
        %583 = vmatpush1.msra.mxu0 0.0
        %584 = vmatprep.subr.mxu0 0.0
        %585 = vmatpush1.msra.mxu0 0.0
        %586 = vmatprep.subr.mxu0 0.0
        %587 = vmatpush1.msra.mxu0 0.0
        %588 = vmatprep.subr.mxu0 0.0
        %589 = vmatpush1.msra.mxu0 0.0
        %590 = vmatprep.subr.mxu0 0.0
        %591 = vmatpush1.msra.mxu0 0.0
        %592 = vmatprep.subr.mxu0 0.0
        %593 = vmatpush1.msra.mxu0 0.0
        %594 = vmatprep.subr.mxu0 0.0
        %595 = vmatpush1.msra.mxu0 0.0
        %596 = vmatprep.subr.mxu0 0.0
        %597 = vmatpush1.msra.mxu0 0.0
        %598 = vmatprep.subr.mxu0 0.0
        %599 = vmatpush1.msra.mxu0 0.0
        %600 = vmatprep.subr.mxu0 0.0
        %601 = vmatpush1.msra.mxu0 0.0
        %602 = vmatprep.subr.mxu0 0.0
        %603 = vmatpush1.msra.mxu0 0.0
        %604 = vmatprep.subr.mxu0 0.0
        %605 = vmatpush1.msra.mxu0 0.0
        %606 = vmatprep.subr.mxu0 0.0
        %607 = vmatpush1.msra.mxu0 0.0
        %608 = vmatprep.subr.mxu0 0.0
        %609 = vmatpush1.msra.mxu0 0.0
        %610 = vmatprep.subr.mxu0 0.0
        %611 = vmatpush1.msra.mxu0 0.0
        %612 = vmatprep.subr.mxu0 0.0
        %613 = vmatpush1.msra.mxu0 0.0
        %614 = vmatprep.subr.mxu0 0.0
        %615 = vmatpush1.msra.mxu0 0.0
        %616 = vmatprep.subr.mxu0 0.0
        %617 = vmatpush1.msra.mxu0 0.0
        %618 = vmatprep.subr.mxu0 0.0
        %619 = vmatpush1.msra.mxu0 0.0
        %620 = vmatprep.subr.mxu0 0.0
        %621 = vmatpush1.msra.mxu0 0.0
        %622 = vmatprep.subr.mxu0 0.0
        %623 = vmatpush1.msra.mxu0 0.0
        %624 = vmatprep.subr.mxu0 0.0
        %625 = vmatpush1.msra.mxu0 0.0
        %626 = vmatprep.subr.mxu0 0.0
        %627 = vmatpush1.msra.mxu0 0.0
        %628 = vmatprep.subr.mxu0 0.0
        %629 = vmatpush1.msra.mxu0 0.0
        %630 = vmatprep.mubr.f32.mxu0 0.0
        %631 = vmatmul.mubr.f32.gmra.mrb[0].mxu0 %v561
        %v632 = vpop.f32.mrb[0].mxu0
        %v633 = vadd.f32 %v557, %v632
        %v634 = vpop.f32.mrb[0].mxu0
        %635 = vmatprep.mubr.f32.mxu0 0.0
        %636 = vmatmul.mubr.f32.gmra.mrb[0].mxu0 %v564
        %v637 = vpop.f32.mrb[0].mxu0
        %v638 = vadd.f32 %v557, %v637
        %v639 = vpop.f32.mrb[0].mxu0
        %640 = vdwg.mxu0
        %vm641 = vcmask 261120
        %v642 = vsel %vm641, %v633, 0.0
        %643 = vadd.xlane.f32.xlu0 %v642
        %v644 = vpop.xlane.xlu0 %643
        %vm645 = vcmask 257024
        %v646 = vsel %vm645, %v638, 0.0
        %647 = vadd.xlane.f32.xlu0 %v646
        %v648 = vpop.xlane.xlu0 %647
        %v649 = vrcp.pop 32.0
        %v650 = vmul.f32 %v644, %v649
        %v651 = vmul.f32 %v648, %v649
        %v652 = vmul.f32 %v633, %v633
        %v653 = vmul.f32 %v638, %v638
        %v654 = vsel %vm641, %v652, 0.0
        %655 = vadd.xlane.f32.xlu0 %v654
        %v656 = vpop.xlane.xlu0 %655
        %v657 = vsel %vm645, %v653, 0.0
        %658 = vadd.xlane.f32.xlu0 %v657
        %v659 = vpop.xlane.xlu0 %658
        %v660 = vmul.f32 %v656, %v649
        %v661 = vmul.f32 %v659, %v649
        %v662 = vmul.f32 %v650, %v650
        %v663 = vmul.f32 %v651, %v651
        %v664 = vsub.f32 %v660, %v662
        %v665 = vsub.f32 %v661, %v663
        %v666 = vsub.f32 %v633, %v650
        %v667 = vsub.f32 %v638, %v651
        %v668 = vadd.f32 %v664, 1e-05
        %v669 = vadd.f32 %v665, 1e-05
        %v670 = vrsqrt.pop %v668
        %v671 = vrsqrt.pop %v669
        %v672 = vmul.f32 %v666, %v670
        %v673 = vmul.f32 %v667, %v671
        %v674 = vld [vmem:[%s3] sm:$0x1]
        %v676 = vlaneseq
        %v677 = vshrl.u32 %v676, 7
        %v678 = vsub.s32 0, %v677
        %v679 = vrot.slane %v674, %v678
        %v681 = vmul.f32 %v672, %v679
        %v682 = vmul.f32 %v673, %v679
        %v683 = vld [vmem:[%s4] sm:$0x1]
        %v685 = vlaneseq
        %v686 = vshrl.u32 %v685, 7
        %v687 = vsub.s32 0, %v686
        %v688 = vrot.slane %v683, %v687
        %v690 = vadd.f32 %v681, %v688
        %v691 = vadd.f32 %v682, %v688
        %v692 = vtanh.pop %v690
        %v693 = vtanh.pop %v691
        %v694 = vld [vmem:[%s5] sm:$0xff]
        %v695 = vld [vmem:[%s5 + $0x8] sm:$0xff]
        %v696 = vld [vmem:[%s5 + $0x10] sm:$0xff]
        %v697 = vld [vmem:[%s5 + $0x18] sm:$0xff]
        %v698 = vld [vmem:[%s6] sm:$0x1]
        %v700 = vlaneseq
        %v701 = vshrl.u32 %v700, 7
        %v702 = vsub.s32 0, %v701
        %v703 = vrot.slane %v698, %v702
        %v706 = vsel %vm641, %v692, 0
        %v709 = vsel %vm641, %v693, 0
        %711 = vmatprep.subr.mxu0 0.0
        %712 = vmatpush1.msra.mxu0 %v694
        %713 = vmatprep.subr.mxu0 0.0
        %714 = vmatpush1.msra.mxu0 %v695
        %715 = vmatprep.subr.mxu0 0.0
        %716 = vmatpush1.msra.mxu0 %v696
        %717 = vmatprep.subr.mxu0 0.0
        %718 = vmatpush1.msra.mxu0 %v697
        %719 = vmatprep.subr.mxu0 0.0
        %720 = vmatpush1.msra.mxu0 0.0
        %721 = vmatprep.subr.mxu0 0.0
        %722 = vmatpush1.msra.mxu0 0.0
        %723 = vmatprep.subr.mxu0 0.0
        %724 = vmatpush1.msra.mxu0 0.0
        %725 = vmatprep.subr.mxu0 0.0
        %726 = vmatpush1.msra.mxu0 0.0
        %727 = vmatprep.subr.mxu0 0.0
        %728 = vmatpush1.msra.mxu0 0.0
        %729 = vmatprep.subr.mxu0 0.0
        %730 = vmatpush1.msra.mxu0 0.0
        %731 = vmatprep.subr.mxu0 0.0
        %732 = vmatpush1.msra.mxu0 0.0
        %733 = vmatprep.subr.mxu0 0.0
        %734 = vmatpush1.msra.mxu0 0.0
        %735 = vmatprep.subr.mxu0 0.0
        %736 = vmatpush1.msra.mxu0 0.0
        %737 = vmatprep.subr.mxu0 0.0
        %738 = vmatpush1.msra.mxu0 0.0
        %739 = vmatprep.subr.mxu0 0.0
        %740 = vmatpush1.msra.mxu0 0.0
        %741 = vmatprep.subr.mxu0 0.0
        %742 = vmatpush1.msra.mxu0 0.0
        %743 = vmatprep.subr.mxu0 0.0
        %744 = vmatpush1.msra.mxu0 0.0
        %745 = vmatprep.subr.mxu0 0.0
        %746 = vmatpush1.msra.mxu0 0.0
        %747 = vmatprep.subr.mxu0 0.0
        %748 = vmatpush1.msra.mxu0 0.0
        %749 = vmatprep.subr.mxu0 0.0
        %750 = vmatpush1.msra.mxu0 0.0
        %751 = vmatprep.subr.mxu0 0.0
        %752 = vmatpush1.msra.mxu0 0.0
        %753 = vmatprep.subr.mxu0 0.0
        %754 = vmatpush1.msra.mxu0 0.0
        %755 = vmatprep.subr.mxu0 0.0
        %756 = vmatpush1.msra.mxu0 0.0
        %757 = vmatprep.subr.mxu0 0.0
        %758 = vmatpush1.msra.mxu0 0.0
        %759 = vmatprep.subr.mxu0 0.0
        %760 = vmatpush1.msra.mxu0 0.0
        %761 = vmatprep.subr.mxu0 0.0
        %762 = vmatpush1.msra.mxu0 0.0
        %763 = vmatprep.subr.mxu0 0.0
        %764 = vmatpush1.msra.mxu0 0.0
        %765 = vmatprep.subr.mxu0 0.0
        %766 = vmatpush1.msra.mxu0 0.0
        %767 = vmatprep.subr.mxu0 0.0
        %768 = vmatpush1.msra.mxu0 0.0
        %769 = vmatprep.subr.mxu0 0.0
        %770 = vmatpush1.msra.mxu0 0.0
        %771 = vmatprep.subr.mxu0 0.0
        %772 = vmatpush1.msra.mxu0 0.0
        %773 = vmatprep.subr.mxu0 0.0
        %774 = vmatpush1.msra.mxu0 0.0
        %775 = vmatprep.mubr.f32.mxu0 0.0
        %776 = vmatmul.mubr.f32.gmra.mrb[0].mxu0 %v706
        %v777 = vpop.f32.mrb[0].mxu0
        %v778 = vadd.f32 %v703, %v777
        %v779 = vpop.f32.mrb[0].mxu0
        %780 = vmatprep.mubr.f32.mxu0 0.0
        %781 = vmatmul.mubr.f32.gmra.mrb[0].mxu0 %v709
        %v782 = vpop.f32.mrb[0].mxu0
        %v783 = vadd.f32 %v703, %v782
        %v784 = vpop.f32.mrb[0].mxu0
        %785 = vdwg.mxu0
        %v786 = vtanh.pop %v778
        %v787 = vtanh.pop %v783
        %v788 = vld [vmem:[%s7] sm:$0xff]
        %v789 = vld [vmem:[%s7 + $0x8] sm:$0xff]
        %v790 = vld [vmem:[%s7 + $0x10] sm:$0xff]
        %v791 = vld [vmem:[%s7 + $0x18] sm:$0xff]
        %v792 = vld [vmem:[%s7 + $0x20] sm:$0xff]
        %v793 = vld [vmem:[%s7 + $0x28] sm:$0xff]
        %v794 = vld [vmem:[%s7 + $0x30] sm:$0xff]
        %v795 = vld [vmem:[%s7 + $0x38] sm:$0xff]
        %v796 = vld [vmem:[%s8] sm:$0x1]
        %v798 = vlaneseq
        %v799 = vshrl.u32 %v798, 7
        %v800 = vsub.s32 0, %v799
        %v801 = vrot.slane %v796, %v800
        %vm803 = vcmask 523264
        %v805 = vsel %vm803, %v786, 0
        %v808 = vsel %vm803, %v787, 0
        %810 = vmatprep.subr.mxu0 0.0
        %811 = vmatpush1.msra.mxu0 %v788
        %812 = vmatprep.subr.mxu0 0.0
        %813 = vmatpush1.msra.mxu0 %v789
        %814 = vmatprep.subr.mxu0 0.0
        %815 = vmatpush1.msra.mxu0 %v790
        %816 = vmatprep.subr.mxu0 0.0
        %817 = vmatpush1.msra.mxu0 %v791
        %818 = vmatprep.subr.mxu0 0.0
        %819 = vmatpush1.msra.mxu0 %v792
        %820 = vmatprep.subr.mxu0 0.0
        %821 = vmatpush1.msra.mxu0 %v793
        %822 = vmatprep.subr.mxu0 0.0
        %823 = vmatpush1.msra.mxu0 %v794
        %824 = vmatprep.subr.mxu0 0.0
        %825 = vmatpush1.msra.mxu0 %v795
        %826 = vmatprep.subr.mxu0 0.0
        %827 = vmatpush1.msra.mxu0 0.0
        %828 = vmatprep.subr.mxu0 0.0
        %829 = vmatpush1.msra.mxu0 0.0
        %830 = vmatprep.subr.mxu0 0.0
        %831 = vmatpush1.msra.mxu0 0.0
        %832 = vmatprep.subr.mxu0 0.0
        %833 = vmatpush1.msra.mxu0 0.0
        %834 = vmatprep.subr.mxu0 0.0
        %835 = vmatpush1.msra.mxu0 0.0
        %836 = vmatprep.subr.mxu0 0.0
        %837 = vmatpush1.msra.mxu0 0.0
        %838 = vmatprep.subr.mxu0 0.0
        %839 = vmatpush1.msra.mxu0 0.0
        %840 = vmatprep.subr.mxu0 0.0
        %841 = vmatpush1.msra.mxu0 0.0
        %842 = vmatprep.subr.mxu0 0.0
        %843 = vmatpush1.msra.mxu0 0.0
        %844 = vmatprep.subr.mxu0 0.0
        %845 = vmatpush1.msra.mxu0 0.0
        %846 = vmatprep.subr.mxu0 0.0
        %847 = vmatpush1.msra.mxu0 0.0
        %848 = vmatprep.subr.mxu0 0.0
        %849 = vmatpush1.msra.mxu0 0.0
        %850 = vmatprep.subr.mxu0 0.0
        %851 = vmatpush1.msra.mxu0 0.0
        %852 = vmatprep.subr.mxu0 0.0
        %853 = vmatpush1.msra.mxu0 0.0
        %854 = vmatprep.subr.mxu0 0.0
        %855 = vmatpush1.msra.mxu0 0.0
        %856 = vmatprep.subr.mxu0 0.0
        %857 = vmatpush1.msra.mxu0 0.0
        %858 = vmatprep.subr.mxu0 0.0
        %859 = vmatpush1.msra.mxu0 0.0
        %860 = vmatprep.subr.mxu0 0.0
        %861 = vmatpush1.msra.mxu0 0.0
        %862 = vmatprep.subr.mxu0 0.0
        %863 = vmatpush1.msra.mxu0 0.0
        %864 = vmatprep.subr.mxu0 0.0
        %865 = vmatpush1.msra.mxu0 0.0
        %866 = vmatprep.subr.mxu0 0.0
        %867 = vmatpush1.msra.mxu0 0.0
        %868 = vmatprep.subr.mxu0 0.0
        %869 = vmatpush1.msra.mxu0 0.0
        %870 = vmatprep.subr.mxu0 0.0
        %871 = vmatpush1.msra.mxu0 0.0
        %872 = vmatprep.subr.mxu0 0.0
        %873 = vmatpush1.msra.mxu0 0.0
        %874 = vmatprep.mubr.f32.mxu0 0.0
        %875 = vmatmul.mubr.f32.gmra.mrb[0].mxu0 %v805
        %v876 = vpop.f32.mrb[0].mxu0
        %v877 = vadd.f32 %v801, %v876
        %v878 = vpop.f32.mrb[0].mxu0
        %879 = vmatprep.mubr.f32.mxu0 0.0
        %880 = vmatmul.mubr.f32.gmra.mrb[0].mxu0 %v808
        %v881 = vpop.f32.mrb[0].mxu0
        %v882 = vadd.f32 %v801, %v881
        %v883 = vpop.f32.mrb[0].mxu0
        %884 = vdwg.mxu0
        %s885 = sld [smem:[#allocation2]]
        %v886 = vlaneseq
        %v887 = vshrl.u32 %v886, 7
        %v888 = vadd.s32 %v887, 8
        %s889 = smul.u32 %s35, 8
        %s890 = ssub.s32 %s889, 2
        %v891 = vstv %s890
        %v892 = vadd.s32 %v887, %v891
        %v893 = vadd.s32 %v888, %v891
        %vm894 = vcmp.ge.s32.totalorder %v892, 0
        %vm895 = vcmp.ge.s32.totalorder %v893, 0
        %vm896 = vcmp.lt.s32.totalorder %v892, 8
        %vm897 = vcmp.lt.s32.totalorder %v893, 8
        %vm898 = vmand %vm894, %vm896
        %vm899 = vmand %vm895, %vm897
        %v900 = vsel %vm898, 1, 0
        %v901 = vsel %vm899, 1, 0
        %v902 = vcvt.s32.f32 %v900
        %v903 = vcvt.s32.f32 %v901
        %vm904 = vcmp.ge.f32.partialorder %v877, 0.0
        %vm905 = vcmp.ge.f32.partialorder %v882, 0.0
        %v906 = vstv %s885
        %v907 = vmul.f32 %v906, %v877
        %v908 = vmul.f32 %v906, %v882
        %v909 = vsel %vm904, %v877, %v907
        %v910 = vsel %vm905, %v882, %v908
        %v911 = vmul.f32 %v909, %v902
        %v912 = vmul.f32 %v910, %v903
        %v913 = vld [vmem:[#allocation5] sm:$0xff]
        %v914 = vld [vmem:[#allocation5 + $0x8] sm:$0xff]
        %v915 = vld [vmem:[#allocation5 + $0x10] sm:$0xff]
        %v916 = vld [vmem:[#allocation5 + $0x18] sm:$0xff]
        %v917 = vld [vmem:[#allocation5 + $0x20] sm:$0xff]
        %v918 = vld [vmem:[#allocation5 + $0x28] sm:$0xff]
        %v919 = vld [vmem:[#allocation5 + $0x30] sm:$0xff]
        %v920 = vld [vmem:[#allocation5 + $0x38] sm:$0xff]
        %v921 = vld [vmem:[#allocation5 + $0x40] sm:$0xff]
        %v922 = vld [vmem:[#allocation5 + $0x48] sm:$0xff]
        %v923 = vld [vmem:[#allocation5 + $0x50] sm:$0xff]
        %v924 = vld [vmem:[#allocation5 + $0x58] sm:$0xff]
        %v925 = vld [vmem:[#allocation5 + $0x60] sm:$0xff]
        %v926 = vld [vmem:[#allocation5 + $0x68] sm:$0xff]
        %v927 = vld [vmem:[#allocation5 + $0x70] sm:$0xff]
        %v928 = vld [vmem:[#allocation5 + $0x78] sm:$0xff]
        %v929 = vld [vmem:[#allocation5 + $0x80] sm:$0xff]
        %v930 = vld [vmem:[#allocation5 + $0x88] sm:$0xff]
        %v931 = vld [vmem:[#allocation5 + $0x90] sm:$0xff]
        %v932 = vld [vmem:[#allocation5 + $0x98] sm:$0xff]
        %v933 = vld [vmem:[#allocation5 + $0xa0] sm:$0xff]
        %v934 = vld [vmem:[#allocation5 + $0xa8] sm:$0xff]
        %v935 = vld [vmem:[#allocation5 + $0xb0] sm:$0xff]
        %v936 = vld [vmem:[#allocation5 + $0xb8] sm:$0xff]
        %v937 = vld [vmem:[#allocation5 + $0xc0] sm:$0xff]
        %v938 = vld [vmem:[#allocation5 + $0xc8] sm:$0xff]
        %v939 = vld [vmem:[#allocation5 + $0xd0] sm:$0xff]
        %v940 = vld [vmem:[#allocation5 + $0xd8] sm:$0xff]
        %v941 = vld [vmem:[#allocation5 + $0xe0] sm:$0xff]
        %v942 = vld [vmem:[#allocation5 + $0xe8] sm:$0xff]
        %v943 = vld [vmem:[#allocation5 + $0xf0] sm:$0xff]
        %v944 = vld [vmem:[#allocation5 + $0xf8] sm:$0xff]
        %vm947 = vcmask 1046528
        %v948 = vrot.slane %v911, 1
        %v949 = vrot.slane %v912, 1
        %v950 = vsel %vm947, %v948, %v949
        %952 = vmatprep.subr.mxu0 0.0
        %953 = vmatpush1.msra.mxu0 %v929
        %954 = vmatprep.subr.mxu0 0.0
        %955 = vmatpush1.msra.mxu0 %v930
        %956 = vmatprep.subr.mxu0 0.0
        %957 = vmatpush1.msra.mxu0 %v931
        %958 = vmatprep.subr.mxu0 0.0
        %959 = vmatpush1.msra.mxu0 %v932
        %960 = vmatprep.subr.mxu0 0.0
        %961 = vmatpush1.msra.mxu0 %v933
        %962 = vmatprep.subr.mxu0 0.0
        %963 = vmatpush1.msra.mxu0 %v934
        %964 = vmatprep.subr.mxu0 0.0
        %965 = vmatpush1.msra.mxu0 %v935
        %966 = vmatprep.subr.mxu0 0.0
        %967 = vmatpush1.msra.mxu0 %v936
        %968 = vmatprep.subr.mxu0 0.0
        %969 = vmatpush1.msra.mxu0 %v937
        %970 = vmatprep.subr.mxu0 0.0
        %971 = vmatpush1.msra.mxu0 %v938
        %972 = vmatprep.subr.mxu0 0.0
        %973 = vmatpush1.msra.mxu0 %v939
        %974 = vmatprep.subr.mxu0 0.0
        %975 = vmatpush1.msra.mxu0 %v940
        %976 = vmatprep.subr.mxu0 0.0
        %977 = vmatpush1.msra.mxu0 %v941
        %978 = vmatprep.subr.mxu0 0.0
        %979 = vmatpush1.msra.mxu0 %v942
        %980 = vmatprep.subr.mxu0 0.0
        %981 = vmatpush1.msra.mxu0 %v943
        %982 = vmatprep.subr.mxu0 0.0
        %983 = vmatpush1.msra.mxu0 %v944
        %984 = vmatprep.subr.mxu0 0.0
        %985 = vmatpush1.msra.mxu0 0.0
        %986 = vmatprep.subr.mxu0 0.0
        %987 = vmatpush1.msra.mxu0 0.0
        %988 = vmatprep.subr.mxu0 0.0
        %989 = vmatpush1.msra.mxu0 0.0
        %990 = vmatprep.subr.mxu0 0.0
        %991 = vmatpush1.msra.mxu0 0.0
        %992 = vmatprep.subr.mxu0 0.0
        %993 = vmatpush1.msra.mxu0 0.0
        %994 = vmatprep.subr.mxu0 0.0
        %995 = vmatpush1.msra.mxu0 0.0
        %996 = vmatprep.subr.mxu0 0.0
        %997 = vmatpush1.msra.mxu0 0.0
        %998 = vmatprep.subr.mxu0 0.0
        %999 = vmatpush1.msra.mxu0 0.0
        %1000 = vmatprep.subr.mxu0 0.0
        %1001 = vmatpush1.msra.mxu0 0.0
        %1002 = vmatprep.subr.mxu0 0.0
        %1003 = vmatpush1.msra.mxu0 0.0
        %1004 = vmatprep.subr.mxu0 0.0
        %1005 = vmatpush1.msra.mxu0 0.0
        %1006 = vmatprep.subr.mxu0 0.0
        %1007 = vmatpush1.msra.mxu0 0.0
        %1008 = vmatprep.subr.mxu0 0.0
        %1009 = vmatpush1.msra.mxu0 0.0
        %1010 = vmatprep.subr.mxu0 0.0
        %1011 = vmatpush1.msra.mxu0 0.0
        %1012 = vmatprep.subr.mxu0 0.0
        %1013 = vmatpush1.msra.mxu0 0.0
        %1014 = vmatprep.subr.mxu0 0.0
        %1015 = vmatpush1.msra.mxu0 0.0
        %1016 = vmatprep.mubr.f32.mxu0 0.0
        %1017 = vmatmul.mubr.f32.gmra.mrb[0].mxu0 %v950
        %v1018 = vpop.f32.mrb[0].mxu0
        %v1019 = vadd.f32 0.0, %v1018
        %v1020 = vpop.f32.mrb[0].mxu0
        %1021 = vdwg.mxu0
        %1022 = vmatprep.subr.mxu0 0.0
        %1023 = vmatpush1.msra.mxu0 %v913
        %1024 = vmatprep.subr.mxu0 0.0
        %1025 = vmatpush1.msra.mxu0 %v914
        %1026 = vmatprep.subr.mxu0 0.0
        %1027 = vmatpush1.msra.mxu0 %v915
        %1028 = vmatprep.subr.mxu0 0.0
        %1029 = vmatpush1.msra.mxu0 %v916
        %1030 = vmatprep.subr.mxu0 0.0
        %1031 = vmatpush1.msra.mxu0 %v917
        %1032 = vmatprep.subr.mxu0 0.0
        %1033 = vmatpush1.msra.mxu0 %v918
        %1034 = vmatprep.subr.mxu0 0.0
        %1035 = vmatpush1.msra.mxu0 %v919
        %1036 = vmatprep.subr.mxu0 0.0
        %1037 = vmatpush1.msra.mxu0 %v920
        %1038 = vmatprep.subr.mxu0 0.0
        %1039 = vmatpush1.msra.mxu0 %v921
        %1040 = vmatprep.subr.mxu0 0.0
        %1041 = vmatpush1.msra.mxu0 %v922
        %1042 = vmatprep.subr.mxu0 0.0
        %1043 = vmatpush1.msra.mxu0 %v923
        %1044 = vmatprep.subr.mxu0 0.0
        %1045 = vmatpush1.msra.mxu0 %v924
        %1046 = vmatprep.subr.mxu0 0.0
        %1047 = vmatpush1.msra.mxu0 %v925
        %1048 = vmatprep.subr.mxu0 0.0
        %1049 = vmatpush1.msra.mxu0 %v926
        %1050 = vmatprep.subr.mxu0 0.0
        %1051 = vmatpush1.msra.mxu0 %v927
        %1052 = vmatprep.subr.mxu0 0.0
        %1053 = vmatpush1.msra.mxu0 %v928
        %1054 = vmatprep.subr.mxu0 0.0
        %1055 = vmatpush1.msra.mxu0 0.0
        %1056 = vmatprep.subr.mxu0 0.0
        %1057 = vmatpush1.msra.mxu0 0.0
        %1058 = vmatprep.subr.mxu0 0.0
        %1059 = vmatpush1.msra.mxu0 0.0
        %1060 = vmatprep.subr.mxu0 0.0
        %1061 = vmatpush1.msra.mxu0 0.0
        %1062 = vmatprep.subr.mxu0 0.0
        %1063 = vmatpush1.msra.mxu0 0.0
        %1064 = vmatprep.subr.mxu0 0.0
        %1065 = vmatpush1.msra.mxu0 0.0
        %1066 = vmatprep.subr.mxu0 0.0
        %1067 = vmatpush1.msra.mxu0 0.0
        %1068 = vmatprep.subr.mxu0 0.0
        %1069 = vmatpush1.msra.mxu0 0.0
        %1070 = vmatprep.subr.mxu0 0.0
        %1071 = vmatpush1.msra.mxu0 0.0
        %1072 = vmatprep.subr.mxu0 0.0
        %1073 = vmatpush1.msra.mxu0 0.0
        %1074 = vmatprep.subr.mxu0 0.0
        %1075 = vmatpush1.msra.mxu0 0.0
        %1076 = vmatprep.subr.mxu0 0.0
        %1077 = vmatpush1.msra.mxu0 0.0
        %1078 = vmatprep.subr.mxu0 0.0
        %1079 = vmatpush1.msra.mxu0 0.0
        %1080 = vmatprep.subr.mxu0 0.0
        %1081 = vmatpush1.msra.mxu0 0.0
        %1082 = vmatprep.subr.mxu0 0.0
        %1083 = vmatpush1.msra.mxu0 0.0
        %1084 = vmatprep.subr.mxu0 0.0
        %1085 = vmatpush1.msra.mxu0 0.0
        %1086 = vmatprep.mubr.f32.mxu0 0.0
        %1087 = vmatmul.mubr.f32.gmra.mrb[0].mxu0 %v911
        %v1088 = vpop.f32.mrb[0].mxu0
        %v1089 = vadd.f32 %v1019, %v1088
        %v1090 = vpop.f32.mrb[0].mxu0
        %1091 = vdwg.mxu0
        %v1092 = vld [vmem:[#allocation5 + $0x100] sm:$0xff]
        %v1093 = vld [vmem:[#allocation5 + $0x108] sm:$0xff]
        %v1094 = vld [vmem:[#allocation5 + $0x110] sm:$0xff]
        %v1095 = vld [vmem:[#allocation5 + $0x118] sm:$0xff]
        %v1096 = vld [vmem:[#allocation5 + $0x120] sm:$0xff]
        %v1097 = vld [vmem:[#allocation5 + $0x128] sm:$0xff]
        %v1098 = vld [vmem:[#allocation5 + $0x130] sm:$0xff]
        %v1099 = vld [vmem:[#allocation5 + $0x138] sm:$0xff]
        %v1100 = vld [vmem:[#allocation5 + $0x140] sm:$0xff]
        %v1101 = vld [vmem:[#allocation5 + $0x148] sm:$0xff]
        %v1102 = vld [vmem:[#allocation5 + $0x150] sm:$0xff]
        %v1103 = vld [vmem:[#allocation5 + $0x158] sm:$0xff]
        %v1104 = vld [vmem:[#allocation5 + $0x160] sm:$0xff]
        %v1105 = vld [vmem:[#allocation5 + $0x168] sm:$0xff]
        %v1106 = vld [vmem:[#allocation5 + $0x170] sm:$0xff]
        %v1107 = vld [vmem:[#allocation5 + $0x178] sm:$0xff]
        %vm1108 = vcmask 1045504
        %v1109 = vrot.slane %v911, 2
        %v1110 = vrot.slane %v912, 2
        %v1111 = vsel %vm1108, %v1109, %v1110
        %1113 = vmatprep.subr.mxu0 0.0
        %1114 = vmatpush1.msra.mxu0 %v1092
        %1115 = vmatprep.subr.mxu0 0.0
        %1116 = vmatpush1.msra.mxu0 %v1093
        %1117 = vmatprep.subr.mxu0 0.0
        %1118 = vmatpush1.msra.mxu0 %v1094
        %1119 = vmatprep.subr.mxu0 0.0
        %1120 = vmatpush1.msra.mxu0 %v1095
        %1121 = vmatprep.subr.mxu0 0.0
        %1122 = vmatpush1.msra.mxu0 %v1096
        %1123 = vmatprep.subr.mxu0 0.0
        %1124 = vmatpush1.msra.mxu0 %v1097
        %1125 = vmatprep.subr.mxu0 0.0
        %1126 = vmatpush1.msra.mxu0 %v1098
        %1127 = vmatprep.subr.mxu0 0.0
        %1128 = vmatpush1.msra.mxu0 %v1099
        %1129 = vmatprep.subr.mxu0 0.0
        %1130 = vmatpush1.msra.mxu0 %v1100
        %1131 = vmatprep.subr.mxu0 0.0
        %1132 = vmatpush1.msra.mxu0 %v1101
        %1133 = vmatprep.subr.mxu0 0.0
        %1134 = vmatpush1.msra.mxu0 %v1102
        %1135 = vmatprep.subr.mxu0 0.0
        %1136 = vmatpush1.msra.mxu0 %v1103
        %1137 = vmatprep.subr.mxu0 0.0
        %1138 = vmatpush1.msra.mxu0 %v1104
        %1139 = vmatprep.subr.mxu0 0.0
        %1140 = vmatpush1.msra.mxu0 %v1105
        %1141 = vmatprep.subr.mxu0 0.0
        %1142 = vmatpush1.msra.mxu0 %v1106
        %1143 = vmatprep.subr.mxu0 0.0
        %1144 = vmatpush1.msra.mxu0 %v1107
        %1145 = vmatprep.subr.mxu0 0.0
        %1146 = vmatpush1.msra.mxu0 0.0
        %1147 = vmatprep.subr.mxu0 0.0
        %1148 = vmatpush1.msra.mxu0 0.0
        %1149 = vmatprep.subr.mxu0 0.0
        %1150 = vmatpush1.msra.mxu0 0.0
        %1151 = vmatprep.subr.mxu0 0.0
        %1152 = vmatpush1.msra.mxu0 0.0
        %1153 = vmatprep.subr.mxu0 0.0
        %1154 = vmatpush1.msra.mxu0 0.0
        %1155 = vmatprep.subr.mxu0 0.0
        %1156 = vmatpush1.msra.mxu0 0.0
        %1157 = vmatprep.subr.mxu0 0.0
        %1158 = vmatpush1.msra.mxu0 0.0
        %1159 = vmatprep.subr.mxu0 0.0
        %1160 = vmatpush1.msra.mxu0 0.0
        %1161 = vmatprep.subr.mxu0 0.0
        %1162 = vmatpush1.msra.mxu0 0.0
        %1163 = vmatprep.subr.mxu0 0.0
        %1164 = vmatpush1.msra.mxu0 0.0
        %1165 = vmatprep.subr.mxu0 0.0
        %1166 = vmatpush1.msra.mxu0 0.0
        %1167 = vmatprep.subr.mxu0 0.0
        %1168 = vmatpush1.msra.mxu0 0.0
        %1169 = vmatprep.subr.mxu0 0.0
        %1170 = vmatpush1.msra.mxu0 0.0
        %1171 = vmatprep.subr.mxu0 0.0
        %1172 = vmatpush1.msra.mxu0 0.0
        %1173 = vmatprep.subr.mxu0 0.0
        %1174 = vmatpush1.msra.mxu0 0.0
        %1175 = vmatprep.subr.mxu0 0.0
        %1176 = vmatpush1.msra.mxu0 0.0
        %1177 = vmatprep.mubr.f32.mxu0 0.0
        %1178 = vmatmul.mubr.f32.gmra.mrb[0].mxu0 %v1111
        %v1179 = vpop.f32.mrb[0].mxu0
        %v1180 = vadd.f32 0.0, %v1179
        %v1181 = vpop.f32.mrb[0].mxu0
        %1182 = vdwg.mxu0
        %v1183 = vadd.f32 %v1089, %v1180
        %v1184 = vld [vmem:[#allocation5 + $0x180] sm:$0xff]
        %v1185 = vld [vmem:[#allocation5 + $0x188] sm:$0xff]
        %v1186 = vld [vmem:[#allocation5 + $0x190] sm:$0xff]
        %v1187 = vld [vmem:[#allocation5 + $0x198] sm:$0xff]
        %v1188 = vld [vmem:[#allocation5 + $0x1a0] sm:$0xff]
        %v1189 = vld [vmem:[#allocation5 + $0x1a8] sm:$0xff]
        %v1190 = vld [vmem:[#allocation5 + $0x1b0] sm:$0xff]
        %v1191 = vld [vmem:[#allocation5 + $0x1b8] sm:$0xff]
        %v1192 = vld [vmem:[#allocation5 + $0x1c0] sm:$0xff]
        %v1193 = vld [vmem:[#allocation5 + $0x1c8] sm:$0xff]
        %v1194 = vld [vmem:[#allocation5 + $0x1d0] sm:$0xff]
        %v1195 = vld [vmem:[#allocation5 + $0x1d8] sm:$0xff]
        %v1196 = vld [vmem:[#allocation5 + $0x1e0] sm:$0xff]
        %v1197 = vld [vmem:[#allocation5 + $0x1e8] sm:$0xff]
        %v1198 = vld [vmem:[#allocation5 + $0x1f0] sm:$0xff]
        %v1199 = vld [vmem:[#allocation5 + $0x1f8] sm:$0xff]
        %vm1200 = vcmask 1044480
        %v1201 = vrot.slane %v911, 3
        %v1202 = vrot.slane %v912, 3
        %v1203 = vsel %vm1200, %v1201, %v1202
        %1205 = vmatprep.subr.mxu0 0.0
        %1206 = vmatpush1.msra.mxu0 %v1184
        %1207 = vmatprep.subr.mxu0 0.0
        %1208 = vmatpush1.msra.mxu0 %v1185
        %1209 = vmatprep.subr.mxu0 0.0
        %1210 = vmatpush1.msra.mxu0 %v1186
        %1211 = vmatprep.subr.mxu0 0.0
        %1212 = vmatpush1.msra.mxu0 %v1187
        %1213 = vmatprep.subr.mxu0 0.0
        %1214 = vmatpush1.msra.mxu0 %v1188
        %1215 = vmatprep.subr.mxu0 0.0
        %1216 = vmatpush1.msra.mxu0 %v1189
        %1217 = vmatprep.subr.mxu0 0.0
        %1218 = vmatpush1.msra.mxu0 %v1190
        %1219 = vmatprep.subr.mxu0 0.0
        %1220 = vmatpush1.msra.mxu0 %v1191
        %1221 = vmatprep.subr.mxu0 0.0
        %1222 = vmatpush1.msra.mxu0 %v1192
        %1223 = vmatprep.subr.mxu0 0.0
        %1224 = vmatpush1.msra.mxu0 %v1193
        %1225 = vmatprep.subr.mxu0 0.0
        %1226 = vmatpush1.msra.mxu0 %v1194
        %1227 = vmatprep.subr.mxu0 0.0
        %1228 = vmatpush1.msra.mxu0 %v1195
        %1229 = vmatprep.subr.mxu0 0.0
        %1230 = vmatpush1.msra.mxu0 %v1196
        %1231 = vmatprep.subr.mxu0 0.0
        %1232 = vmatpush1.msra.mxu0 %v1197
        %1233 = vmatprep.subr.mxu0 0.0
        %1234 = vmatpush1.msra.mxu0 %v1198
        %1235 = vmatprep.subr.mxu0 0.0
        %1236 = vmatpush1.msra.mxu0 %v1199
        %1237 = vmatprep.subr.mxu0 0.0
        %1238 = vmatpush1.msra.mxu0 0.0
        %1239 = vmatprep.subr.mxu0 0.0
        %1240 = vmatpush1.msra.mxu0 0.0
        %1241 = vmatprep.subr.mxu0 0.0
        %1242 = vmatpush1.msra.mxu0 0.0
        %1243 = vmatprep.subr.mxu0 0.0
        %1244 = vmatpush1.msra.mxu0 0.0
        %1245 = vmatprep.subr.mxu0 0.0
        %1246 = vmatpush1.msra.mxu0 0.0
        %1247 = vmatprep.subr.mxu0 0.0
        %1248 = vmatpush1.msra.mxu0 0.0
        %1249 = vmatprep.subr.mxu0 0.0
        %1250 = vmatpush1.msra.mxu0 0.0
        %1251 = vmatprep.subr.mxu0 0.0
        %1252 = vmatpush1.msra.mxu0 0.0
        %1253 = vmatprep.subr.mxu0 0.0
        %1254 = vmatpush1.msra.mxu0 0.0
        %1255 = vmatprep.subr.mxu0 0.0
        %1256 = vmatpush1.msra.mxu0 0.0
        %1257 = vmatprep.subr.mxu0 0.0
        %1258 = vmatpush1.msra.mxu0 0.0
        %1259 = vmatprep.subr.mxu0 0.0
        %1260 = vmatpush1.msra.mxu0 0.0
        %1261 = vmatprep.subr.mxu0 0.0
        %1262 = vmatpush1.msra.mxu0 0.0
        %1263 = vmatprep.subr.mxu0 0.0
        %1264 = vmatpush1.msra.mxu0 0.0
        %1265 = vmatprep.subr.mxu0 0.0
        %1266 = vmatpush1.msra.mxu0 0.0
        %1267 = vmatprep.subr.mxu0 0.0
        %1268 = vmatpush1.msra.mxu0 0.0
        %1269 = vmatprep.mubr.f32.mxu0 0.0
        %1270 = vmatmul.mubr.f32.gmra.mrb[0].mxu0 %v1203
        %v1271 = vpop.f32.mrb[0].mxu0
        %v1272 = vadd.f32 0.0, %v1271
        %v1273 = vpop.f32.mrb[0].mxu0
        %1274 = vdwg.mxu0
        %v1275 = vadd.f32 %v1183, %v1272
        %v1276 = vld [vmem:[#allocation5 + $0x200] sm:$0xff]
        %v1277 = vld [vmem:[#allocation5 + $0x208] sm:$0xff]
        %v1278 = vld [vmem:[#allocation5 + $0x210] sm:$0xff]
        %v1279 = vld [vmem:[#allocation5 + $0x218] sm:$0xff]
        %v1280 = vld [vmem:[#allocation5 + $0x220] sm:$0xff]
        %v1281 = vld [vmem:[#allocation5 + $0x228] sm:$0xff]
        %v1282 = vld [vmem:[#allocation5 + $0x230] sm:$0xff]
        %v1283 = vld [vmem:[#allocation5 + $0x238] sm:$0xff]
        %v1284 = vld [vmem:[#allocation5 + $0x240] sm:$0xff]
        %v1285 = vld [vmem:[#allocation5 + $0x248] sm:$0xff]
        %v1286 = vld [vmem:[#allocation5 + $0x250] sm:$0xff]
        %v1287 = vld [vmem:[#allocation5 + $0x258] sm:$0xff]
        %v1288 = vld [vmem:[#allocation5 + $0x260] sm:$0xff]
        %v1289 = vld [vmem:[#allocation5 + $0x268] sm:$0xff]
        %v1290 = vld [vmem:[#allocation5 + $0x270] sm:$0xff]
        %v1291 = vld [vmem:[#allocation5 + $0x278] sm:$0xff]
        %vm1292 = vcmask 1043456
        %v1293 = vrot.slane %v911, 4
        %v1294 = vrot.slane %v912, 4
        %v1295 = vsel %vm1292, %v1293, %v1294
        %1297 = vmatprep.subr.mxu0 0.0
        %1298 = vmatpush1.msra.mxu0 %v1276
        %1299 = vmatprep.subr.mxu0 0.0
        %1300 = vmatpush1.msra.mxu0 %v1277
        %1301 = vmatprep.subr.mxu0 0.0
        %1302 = vmatpush1.msra.mxu0 %v1278
        %1303 = vmatprep.subr.mxu0 0.0
        %1304 = vmatpush1.msra.mxu0 %v1279
        %1305 = vmatprep.subr.mxu0 0.0
        %1306 = vmatpush1.msra.mxu0 %v1280
        %1307 = vmatprep.subr.mxu0 0.0
        %1308 = vmatpush1.msra.mxu0 %v1281
        %1309 = vmatprep.subr.mxu0 0.0
        %1310 = vmatpush1.msra.mxu0 %v1282
        %1311 = vmatprep.subr.mxu0 0.0
        %1312 = vmatpush1.msra.mxu0 %v1283
        %1313 = vmatprep.subr.mxu0 0.0
        %1314 = vmatpush1.msra.mxu0 %v1284
        %1315 = vmatprep.subr.mxu0 0.0
        %1316 = vmatpush1.msra.mxu0 %v1285
        %1317 = vmatprep.subr.mxu0 0.0
        %1318 = vmatpush1.msra.mxu0 %v1286
        %1319 = vmatprep.subr.mxu0 0.0
        %1320 = vmatpush1.msra.mxu0 %v1287
        %1321 = vmatprep.subr.mxu0 0.0
        %1322 = vmatpush1.msra.mxu0 %v1288
        %1323 = vmatprep.subr.mxu0 0.0
        %1324 = vmatpush1.msra.mxu0 %v1289
        %1325 = vmatprep.subr.mxu0 0.0
        %1326 = vmatpush1.msra.mxu0 %v1290
        %1327 = vmatprep.subr.mxu0 0.0
        %1328 = vmatpush1.msra.mxu0 %v1291
        %1329 = vmatprep.subr.mxu0 0.0
        %1330 = vmatpush1.msra.mxu0 0.0
        %1331 = vmatprep.subr.mxu0 0.0
        %1332 = vmatpush1.msra.mxu0 0.0
        %1333 = vmatprep.subr.mxu0 0.0
        %1334 = vmatpush1.msra.mxu0 0.0
        %1335 = vmatprep.subr.mxu0 0.0
        %1336 = vmatpush1.msra.mxu0 0.0
        %1337 = vmatprep.subr.mxu0 0.0
        %1338 = vmatpush1.msra.mxu0 0.0
        %1339 = vmatprep.subr.mxu0 0.0
        %1340 = vmatpush1.msra.mxu0 0.0
        %1341 = vmatprep.subr.mxu0 0.0
        %1342 = vmatpush1.msra.mxu0 0.0
        %1343 = vmatprep.subr.mxu0 0.0
        %1344 = vmatpush1.msra.mxu0 0.0
        %1345 = vmatprep.subr.mxu0 0.0
        %1346 = vmatpush1.msra.mxu0 0.0
        %1347 = vmatprep.subr.mxu0 0.0
        %1348 = vmatpush1.msra.mxu0 0.0
        %1349 = vmatprep.subr.mxu0 0.0
        %1350 = vmatpush1.msra.mxu0 0.0
        %1351 = vmatprep.subr.mxu0 0.0
        %1352 = vmatpush1.msra.mxu0 0.0
        %1353 = vmatprep.subr.mxu0 0.0
        %1354 = vmatpush1.msra.mxu0 0.0
        %1355 = vmatprep.subr.mxu0 0.0
        %1356 = vmatpush1.msra.mxu0 0.0
        %1357 = vmatprep.subr.mxu0 0.0
        %1358 = vmatpush1.msra.mxu0 0.0
        %1359 = vmatprep.subr.mxu0 0.0
        %1360 = vmatpush1.msra.mxu0 0.0
        %1361 = vmatprep.mubr.f32.mxu0 0.0
        %1362 = vmatmul.mubr.f32.gmra.mrb[0].mxu0 %v1295
        %v1363 = vpop.f32.mrb[0].mxu0
        %v1364 = vadd.f32 0.0, %v1363
        %v1365 = vpop.f32.mrb[0].mxu0
        %1366 = vdwg.mxu0
        %v1367 = vadd.f32 %v1275, %v1364
        %v1368 = vld [vmem:[%s11] sm:$0x1]
        %v1370 = vlaneseq
        %v1371 = vshrl.u32 %v1370, 7
        %v1372 = vsub.s32 0, %v1371
        %v1373 = vrot.slane %v1368, %v1372
        %v1375 = vadd.f32 %v1367, %v1373
        %s1376 = sld [smem:[#allocation3]]
        %vm1377 = vcmp.ge.f32.partialorder %v1375, 0.0
        %v1378 = vstv %s1376
        %v1379 = vmul.f32 %v1378, %v1375
        %v1380 = vsel %vm1377, %v1375, %v1379
        %v1381 = vld [vmem:[%s13] sm:$0xff]
        %v1382 = vld [vmem:[%s13 + $0x8] sm:$0xff]
        %v1383 = vld [vmem:[%s13 + $0x10] sm:$0xff]
        %v1384 = vld [vmem:[%s13 + $0x18] sm:$0xff]
        %v1385 = vld [vmem:[%s13 + $0x20] sm:$0xff]
        %v1386 = vld [vmem:[%s13 + $0x28] sm:$0xff]
        %v1387 = vld [vmem:[%s13 + $0x30] sm:$0xff]
        %v1388 = vld [vmem:[%s13 + $0x38] sm:$0xff]
        %s1389 = sld [smem:[#allocation4]]
        %v1390 = vstv %s1389
        %v1392 = vsel %vm803, %v1380, 0
        %1394 = vmatprep.subr.mxu0 0.0
        %1395 = vmatpush1.msra.mxu0 %v1381
        %1396 = vmatprep.subr.mxu0 0.0
        %1397 = vmatpush1.msra.mxu0 %v1382
        %1398 = vmatprep.subr.mxu0 0.0
        %1399 = vmatpush1.msra.mxu0 %v1383
        %1400 = vmatprep.subr.mxu0 0.0
        %1401 = vmatpush1.msra.mxu0 %v1384
        %1402 = vmatprep.subr.mxu0 0.0
        %1403 = vmatpush1.msra.mxu0 %v1385
        %1404 = vmatprep.subr.mxu0 0.0
        %1405 = vmatpush1.msra.mxu0 %v1386
        %1406 = vmatprep.subr.mxu0 0.0
        %1407 = vmatpush1.msra.mxu0 %v1387
        %1408 = vmatprep.subr.mxu0 0.0
        %1409 = vmatpush1.msra.mxu0 %v1388
        %1410 = vmatprep.subr.mxu0 0.0
        %1411 = vmatpush1.msra.mxu0 0.0
        %1412 = vmatprep.subr.mxu0 0.0
        %1413 = vmatpush1.msra.mxu0 0.0
        %1414 = vmatprep.subr.mxu0 0.0
        %1415 = vmatpush1.msra.mxu0 0.0
        %1416 = vmatprep.subr.mxu0 0.0
        %1417 = vmatpush1.msra.mxu0 0.0
        %1418 = vmatprep.subr.mxu0 0.0
        %1419 = vmatpush1.msra.mxu0 0.0
        %1420 = vmatprep.subr.mxu0 0.0
        %1421 = vmatpush1.msra.mxu0 0.0
        %1422 = vmatprep.subr.mxu0 0.0
        %1423 = vmatpush1.msra.mxu0 0.0
        %1424 = vmatprep.subr.mxu0 0.0
        %1425 = vmatpush1.msra.mxu0 0.0
        %1426 = vmatprep.subr.mxu0 0.0
        %1427 = vmatpush1.msra.mxu0 0.0
        %1428 = vmatprep.subr.mxu0 0.0
        %1429 = vmatpush1.msra.mxu0 0.0
        %1430 = vmatprep.subr.mxu0 0.0
        %1431 = vmatpush1.msra.mxu0 0.0
        %1432 = vmatprep.subr.mxu0 0.0
        %1433 = vmatpush1.msra.mxu0 0.0
        %1434 = vmatprep.subr.mxu0 0.0
        %1435 = vmatpush1.msra.mxu0 0.0
        %1436 = vmatprep.subr.mxu0 0.0
        %1437 = vmatpush1.msra.mxu0 0.0
        %1438 = vmatprep.subr.mxu0 0.0
        %1439 = vmatpush1.msra.mxu0 0.0
        %1440 = vmatprep.subr.mxu0 0.0
        %1441 = vmatpush1.msra.mxu0 0.0
        %1442 = vmatprep.subr.mxu0 0.0
        %1443 = vmatpush1.msra.mxu0 0.0
        %1444 = vmatprep.subr.mxu0 0.0
        %1445 = vmatpush1.msra.mxu0 0.0
        %1446 = vmatprep.subr.mxu0 0.0
        %1447 = vmatpush1.msra.mxu0 0.0
        %1448 = vmatprep.subr.mxu0 0.0
        %1449 = vmatpush1.msra.mxu0 0.0
        %1450 = vmatprep.subr.mxu0 0.0
        %1451 = vmatpush1.msra.mxu0 0.0
        %1452 = vmatprep.subr.mxu0 0.0
        %1453 = vmatpush1.msra.mxu0 0.0
        %1454 = vmatprep.subr.mxu0 0.0
        %1455 = vmatpush1.msra.mxu0 0.0
        %1456 = vmatprep.subr.mxu0 0.0
        %1457 = vmatpush1.msra.mxu0 0.0
        %1458 = vmatprep.mubr.f32.mxu0 0.0
        %1459 = vmatmul.mubr.f32.gmra.mrb[0].mxu0 %v1392
        %v1460 = vpop.f32.mrb[0].mxu0
        %v1461 = vadd.f32 %v1390, %v1460
        %v1462 = vpop.f32.mrb[0].mxu0
        %1463 = vdwg.mxu0
        %v1464 = vtanh.pop %v1461
        %vm1465 = vcmask 31744
        %1466 = vst.msk [vmem:[%s544] sm:$0xff] %vm1465, %v1464
        %p1467 = scmp.lt.s32.totalorder %s34, 1
        %s1468 = scalar_select %p1467, %s34, 1
        %p1469 = scmp.lt.s32.totalorder %s35, 0
        %s1470 = scalar_select %p1469, %s35, 0
        %s1471 = sadd.s32 %s1470, %s1468
        %s1472 = smul.addr %s1471, 8
        %s1473 = scalar_lea.vmem %s15, %s1472
        // Predicated region
        $region85: #{_lambda_.1} parent=79 // pred_check
          %p1474 = pneg %p384
        $region86: #{_lambda_.1} parent=79 // pred_check_branch
          %1476 = sbr.rel (%p1474) target = $region88
        $region87: #{_lambda_.1} parent=79 // pred_region
          _
        $region88: #{_lambda_.1} parent=79 // pred_fallthru
          _
      $region80: #{_lambda_.1} parent=5 // pred_fallthru
        _
      %p1477 = scmp.le.s32.totalorder 2, %s25
      // Predicated region
      $region89: #{_lambda_.1} parent=5 // pred_check
        %p1478 = pneg %p1477
      $region90: #{_lambda_.1} parent=5 // pred_check_branch
        %1480 = sbr.rel (%p1478) target = $region92
      $region91: #{_lambda_.1} parent=5 // pred_region
        %s1481 = ssub.s32 %s25, 2
        // Predicated region
        $region93: #{_lambda_.1} parent=91 // pred_check
          %p1482 = pneg %p390
        $region94: #{_lambda_.1} parent=91 // pred_check_branch
          %1484 = sbr.rel (%p1482) target = $region96
        $region95: #{_lambda_.1} parent=91 // pred_region
          %p1485 = scmp.lt.s32.totalorder %s36, 1
          %s1486 = scalar_select %p1485, %s36, 1
          %p1487 = scmp.lt.s32.totalorder %s37, 0
          %s1488 = scalar_select %p1487, %s37, 0
          %s1489 = sadd.s32 %s1488, %s1486
          %s1490 = smul.addr %s1489, 8
          %s1491 = scalar_lea.vmem %s15, %s1490
        $region96: #{_lambda_.1} parent=91 // pred_fallthru
          _
      $region92: #{_lambda_.1} parent=5 // pred_fallthru
        _
    $region6: #{_lambda_.1} parent=1 // loop_footer
      %s29 = sadd.s32 1, %s25
    $region7: #{_lambda_.1} parent=1 // loop_footer_branch
      %24 = sbr.rel target = $region3
    $region8: #{_lambda_.1} parent=1 // loop_exit
      _
    %1492 = vsyncpa [#allocation6], 1
    %s1493 = scalar_lea.sflag [#allocation6], 1
    %1494 = vsyncpa %s1493, 1

</llo_original>
